<compile_context>
chip_gen: v6e
topology: v6e:2x2x1
jax: 0.10.0
libtpu: 0.0.40
codegen_flags: <defaults>
</compile_context>

<pallas_src>
import functools

import jax
import jax.numpy as jnp
from jax import lax
from jax.experimental import pallas as pl
from jax.experimental.pallas import tpu as pltpu


def _round_up(n, m):
    return ((n + m - 1) // m) * m


def _pick_batch_tile(b_pad):
    """b_pad is a multiple of 8. Returns a tile (multiple of 8) dividing b_pad
    that yields >= 2 tiles whenever b_pad >= 16 (v7x megacore)."""
    if b_pad < 16:
        return b_pad
    tb = min(256, b_pad // 2)
    tb = max(8, (tb // 8) * 8)
    while b_pad % tb != 0:
        tb -= 8
    return max(tb, 8)


def _rnn_kernel(x_ref, wih_ref, whh_ref, b_ref, out_ref, xw_ref, *,
                t_chunk, seq_len, mask_tail, unroll):
    # x_ref  : (t_chunk, tb, d_in)   bf16  streamed chunk (d_in unpadded)
    # wih_ref: (d_in, h_pad)         bf16  resident W_ih.T (padded cols zero)
    # whh_ref: (h_pad, h_pad)        bf16  resident W_hh.T (zero-padded)
    # b_ref  : (1, h_pad)            f32   resident b_ih + b_hh (padded cols 0)
    # out_ref: (tb, h_pad)           f32   carries h across the seq grid axis
    # xw_ref : (t_chunk, tb, h_pad)  f32   scratch: chunk-level x@W_ih.T + bias
    t = pl.program_id(1)

    @pl.when(t == 0)
    def _():
        out_ref[...] = jnp.zeros_like(out_ref)

    tb, h_pad = out_ref.shape
    d_in = x_ref.shape[-1]

    # --- hoisted (non-recurrent) input projection, M = t_chunk * tb --------
    x2d = x_ref[...].reshape(t_chunk * tb, d_in)
    xw = jnp.dot(x2d, wih_ref[...], preferred_element_type=jnp.float32)
    xw = xw + b_ref[...]                       # bias folded once per chunk
    xw_ref[...] = xw.reshape(t_chunk, tb, h_pad)

    whh = whh_ref[...]                         # resident bf16 recurrent weight

    def step(i, h):
        pre = xw_ref[i] + jnp.dot(h.astype(jnp.bfloat16), whh,
                                  preferred_element_type=jnp.float32)
        h_new = jnp.tanh(pre)                  # f32 / EUP
        if mask_tail:
            # zero-padded tail timesteps act as identity on h
            h_new = jnp.where(t * t_chunk + i < seq_len, h_new, h)
        return h_new

    out_ref[...] = lax.fori_loop(0, t_chunk, step, out_ref[...], unroll=unroll)


def rnn_cell_encoder(x, w_ih, w_hh, b_ih, b_hh, *, max_t_chunk=64,
                     vmem_budget_bytes=40 << 20):
    """x: (seq, batch, input_dim); PyTorch weight convention:
       w_ih (hidden, input_dim), w_hh (hidden, hidden), biases (hidden,)."""
    seq, batch, input_dim = x.shape
    hidden = w_ih.shape[0]

    h_pad = _round_up(hidden, 128)
    b_pad = _round_up(batch, 8)
    tb = _pick_batch_tile(b_pad)

    # --- t_chunk sized against a generation-safe VMEM budget ---------------
    def vmem_needed(tc):
        d_tile = _round_up(input_dim, 128)                 # VMEM lane padding
        return (_round_up(input_dim, 16) * h_pad * 2 * 2   # W_ih.T  x2 buffers
                + h_pad * h_pad * 2 * 2                    # W_hh.T  x2 buffers
                + 8 * h_pad * 4 * 2                        # bias    x2 buffers
                + tc * _round_up(tb, 16) * d_tile * 2 * 2  # x chunk x2 buffers
                + tb * h_pad * 4 * 2                       # out/h   x2 buffers
                + tc * tb * h_pad * 4)                     # XW scratch

    t_chunk = max(1, min(seq, max_t_chunk))
    while t_chunk > 1 and vmem_needed(t_chunk) > vmem_budget_bytes:
        t_chunk -= 1
    seq_pad = _round_up(seq, t_chunk)
    mask_tail = seq_pad != seq

    # Cap unrolling when the carried (tb, h_pad) f32 tile gets large.
    unroll = t_chunk if tb * h_pad * 4 <= 256 * 1024 else 8

    # --- operands: bf16 MXU inputs; x keeps its unpadded feature dim -------
    x_p = jnp.zeros((seq_pad, b_pad, input_dim), jnp.bfloat16)
    x_p = x_p.at[:seq, :batch, :].set(x.astype(jnp.bfloat16))

    wih_t = jnp.zeros((input_dim, h_pad), jnp.bfloat16)
    wih_t = wih_t.at[:, :hidden].set(
        jnp.asarray(w_ih, jnp.float32).T.astype(jnp.bfloat16))

    whh_t = jnp.zeros((h_pad, h_pad), jnp.bfloat16)
    whh_t = whh_t.at[:hidden, :hidden].set(
        jnp.asarray(w_hh, jnp.float32).T.astype(jnp.bfloat16))

    bias = jnp.zeros((1, h_pad), jnp.float32)
    bias = bias.at[0, :hidden].set(
        jnp.asarray(b_ih, jnp.float32) + jnp.asarray(b_hh, jnp.float32))

    vmem_limit = int(min(max(vmem_needed(t_chunk) + (8 << 20), 16 << 20),
                         64 << 20))

    grid = (b_pad // tb, seq_pad // t_chunk)

    kernel = functools.partial(_rnn_kernel, t_chunk=t_chunk, seq_len=seq,
                               mask_tail=mask_tail, unroll=unroll)

    out = pl.pallas_call(
        kernel,
        out_shape=jax.ShapeDtypeStruct((b_pad, h_pad), jnp.float32),
        grid_spec=pltpu.PrefetchScalarGridSpec(
            num_scalar_prefetch=0,
            grid=grid,
            in_specs=[
                # x chunk: one slab of timesteps per grid step, per batch tile
                pl.BlockSpec((t_chunk, tb, input_dim), lambda b, t: (t, b, 0)),
                # resident weights / bias (same block every step)
                pl.BlockSpec((input_dim, h_pad), lambda b, t: (0, 0)),
                pl.BlockSpec((h_pad, h_pad), lambda b, t: (0, 0)),
                pl.BlockSpec((1, h_pad), lambda b, t: (0, 0)),
            ],
            out_specs=pl.BlockSpec((tb, h_pad), lambda b, t: (b, 0)),
            scratch_shapes=[pltpu.VMEM((t_chunk, tb, h_pad), jnp.float32)],
        ),
        compiler_params=pltpu.CompilerParams(
            # batch tiles independent (megacore); seq is a serial recurrence
            dimension_semantics=("parallel", "arbitrary"),
            vmem_limit_bytes=vmem_limit,
        ),
    )(x_p, wih_t, whh_t, bias)

    return out[:batch, :hidden]


def rnn_cell_encoder_ref(x, w_ih, w_hh, b_ih, b_hh):
    """Pure-JAX f32 reference matching nn.RNNCell semantics."""
    seq = x.shape[0]
    hidden = w_ih.shape[0]
    h = jnp.zeros((x.shape[1], hidden), jnp.float32)
    for t in range(seq):
        h = jnp.tanh(x[t] @ w_ih.T + b_ih + h @ w_hh.T + b_hh)
    return h


def rnn_cell_encoder_ref_bf16(x, w_ih, w_hh, b_ih, b_hh):
    """Reference mimicking the kernel's numerics (bf16 operands, f32 accum)."""
    seq = x.shape[0]
    hidden = w_ih.shape[0]
    wih_t = jnp.asarray(w_ih, jnp.float32).T.astype(jnp.bfloat16)
    whh_t = jnp.asarray(w_hh, jnp.float32).T.astype(jnp.bfloat16)
    b = jnp.asarray(b_ih, jnp.float32) + jnp.asarray(b_hh, jnp.float32)
    xb = x.astype(jnp.bfloat16)
    h = jnp.zeros((x.shape[1], hidden), jnp.float32)
    for t in range(seq):
        xw = jnp.dot(xb[t], wih_t, preferred_element_type=jnp.float32) + b
        pre = xw + jnp.dot(h.astype(jnp.bfloat16), whh_t,
                           preferred_element_type=jnp.float32)
        h = jnp.tanh(pre)
    return h


if __name__ == "__main__":
    # shapes consistent with the module's forward (hidden_size = 300)
    seq_len, batch, input_dim, hidden = 8, 4, 16, 300

    key = jax.random.PRNGKey(0)
    kx, k1, k2, k3, k4 = jax.random.split(key, 5)

    # PyTorch RNNCell init: U(-1/sqrt(H), 1/sqrt(H))
    bound = 1.0 / (hidden ** 0.5)
    w_ih = jax.random.uniform(k1, (hidden, input_dim), jnp.float32, -bound, bound)
    w_hh = jax.random.uniform(k2, (hidden, hidden), jnp.float32, -bound, bound)
    b_ih = jax.random.uniform(k3, (hidden,), jnp.float32, -bound, bound)
    b_hh = jax.random.uniform(k4, (hidden,), jnp.float32, -bound, bound)

    x = jax.random.normal(kx, (seq_len, batch, input_dim), jnp.float32)

    out = jax.block_until_ready(rnn_cell_encoder(x, w_ih, w_hh, b_ih, b_hh))

    ref_bf16 = rnn_cell_encoder_ref_bf16(x, w_ih, w_hh, b_ih, b_hh)
    ref_f32 = rnn_cell_encoder_ref(x, w_ih, w_hh, b_ih, b_hh)

    assert out.shape == (batch, hidden)
    # tight check vs a reference with the same (bf16 operand / f32 accum) numerics
    assert jnp.allclose(out, ref_bf16, atol=5e-3, rtol=5e-3), \
        "mismatch vs bf16-operand reference"
    # loose check vs the exact f32 reference (bf16 rounding over the recurrence)
    assert jnp.allclose(out, ref_f32, atol=5e-2, rtol=5e-2), \
        "mismatch vs f32 reference"

    print("KERNEL_OK")
</pallas_src>

<mosaic_0001>
module attributes {stable_mosaic.version = 11 : i64} {
  func.func @_rnn_kernel(%arg0: i32, %arg1: i32, %arg2: memref<8x8x16xbf16, #tpu.memory_space<vmem>>, %arg3: memref<16x384xbf16, #tpu.memory_space<vmem>>, %arg4: memref<384x384xbf16, #tpu.memory_space<vmem>>, %arg5: memref<1x384xf32, #tpu.memory_space<vmem>>, %arg6: memref<8x384xf32, #tpu.memory_space<vmem>>, %arg7: memref<8x8x384xf32, #tpu.memory_space<vmem>>) attributes {dimension_semantics = [#tpu.dimension_semantics<parallel>, #tpu.dimension_semantics<arbitrary>], iteration_bounds = array<i64: 1, 1>, scalar_prefetch = 0 : i64, scratch_operands = 1 : i64, tpu.core_type = #tpu.core_type<tc>, window_params = [{transform_indices = @transform_0, window_bounds = array<i64: 8, 8, 16>}, {pipeline_mode = #tpu.pipeline_mode<synchronous>, transform_indices = @transform_1, window_bounds = array<i64: 16, 384>}, {pipeline_mode = #tpu.pipeline_mode<synchronous>, transform_indices = @transform_2, window_bounds = array<i64: 384, 384>}, {pipeline_mode = #tpu.pipeline_mode<synchronous>, transform_indices = @transform_3, window_bounds = array<i64: 1, 384>}, {transform_indices = @transform_4, window_bounds = array<i64: 8, 384>}]} {
    %c0_i32 = arith.constant 0 : i32
    %0 = arith.cmpi eq, %arg1, %c0_i32 : i32
    %1 = arith.extui %0 : i1 to i32
    %c0_i32_0 = arith.constant 0 : i32
    %2 = arith.cmpi ne, %1, %c0_i32_0 : i32
    scf.if %2 {
      %cst_41 = arith.constant 0.000000e+00 : f32
      %71 = vector.broadcast %cst_41 : f32 to vector<8x384xf32>
      %c0_42 = arith.constant 0 : index
      %c0_43 = arith.constant 0 : index
      %72 = vector.load %arg6[%c0_42, %c0_43] : memref<8x384xf32, #tpu.memory_space<vmem>>, vector<8x384xf32>
      tpu.vector_store %arg6[%c0_42, %c0_43], %71 {strides = array<i32>} : memref<8x384xf32, #tpu.memory_space<vmem>>, vector<8x384xf32>,
    } else {
    }
    %c0 = arith.constant 0 : index
    %c0_1 = arith.constant 0 : index
    %c0_2 = arith.constant 0 : index
    %3 = vector.load %arg2[%c0, %c0_1, %c0_2] : memref<8x8x16xbf16, #tpu.memory_space<vmem>>, vector<8x8x16xbf16>
    %4 = vector.shape_cast %3 : vector<8x8x16xbf16> to vector<64x16xbf16>
    %c0_3 = arith.constant 0 : index
    %c0_4 = arith.constant 0 : index
    %5 = vector.load %arg3[%c0_3, %c0_4] : memref<16x384xbf16, #tpu.memory_space<vmem>>, vector<16x384xbf16>
    %cst = arith.constant dense<0.000000e+00> : vector<64x384xf32>
    %6 = tpu.matmul %4, %5, %cst {dimension_numbers = #tpu.dot_dimension_numbers<[1], [0], [0], [1], [0, 0, 1, 1], [], []>} : vector<64x16xbf16>, vector<16x384xbf16>, vector<64x384xf32> -> vector<64x384xf32>
    %c0_5 = arith.constant 0 : index
    %c0_6 = arith.constant 0 : index
    %7 = vector.load %arg5[%c0_5, %c0_6] : memref<1x384xf32, #tpu.memory_space<vmem>>, vector<1x384xf32>
    %8 = vector.broadcast %7 : vector<1x384xf32> to vector<64x384xf32>
    %9 = arith.addf %6, %8 : vector<64x384xf32>
    %10 = vector.shape_cast %9 : vector<64x384xf32> to vector<8x8x384xf32>
    %c0_7 = arith.constant 0 : index
    %c0_8 = arith.constant 0 : index
    %c0_9 = arith.constant 0 : index
    %11 = vector.load %arg7[%c0_7, %c0_8, %c0_9] : memref<8x8x384xf32, #tpu.memory_space<vmem>>, vector<8x8x384xf32>
    tpu.vector_store %arg7[%c0_7, %c0_8, %c0_9], %10 {strides = array<i32>} : memref<8x8x384xf32, #tpu.memory_space<vmem>>, vector<8x8x384xf32>,
    %c0_10 = arith.constant 0 : index
    %c0_11 = arith.constant 0 : index
    %12 = vector.load %arg4[%c0_10, %c0_11] : memref<384x384xbf16, #tpu.memory_space<vmem>>, vector<384x384xbf16>
    %c0_12 = arith.constant 0 : index
    %c0_13 = arith.constant 0 : index
    %13 = vector.load %arg6[%c0_12, %c0_13] : memref<8x384xf32, #tpu.memory_space<vmem>>, vector<8x384xf32>
    %c0_i32_14 = arith.constant 0 : i32
    %14 = arith.index_cast %c0_i32_14 : i32 to index
    %c0_15 = arith.constant 0 : index
    %c0_16 = arith.constant 0 : index
    %15 = vector.load %arg7[%14, %c0_15, %c0_16] : memref<8x8x384xf32, #tpu.memory_space<vmem>>, vector<1x8x384xf32>
    %16 = vector.shape_cast %15 : vector<1x8x384xf32> to vector<8x384xf32>
    %17 = arith.truncf %13 : vector<8x384xf32> to vector<8x384xbf16>
    %cst_17 = arith.constant dense<0.000000e+00> : vector<8x384xf32>
    %18 = tpu.matmul %17, %12, %cst_17 {dimension_numbers = #tpu.dot_dimension_numbers<[1], [0], [0], [1], [0, 0, 1, 1], [], []>} : vector<8x384xbf16>, vector<384x384xbf16>, vector<8x384xf32> -> vector<8x384xf32>
    %19 = arith.addf %16, %18 : vector<8x384xf32>
    %20 = math.tanh %19 : vector<8x384xf32>
    %c1_i32 = arith.constant 1 : i32
    %21 = arith.index_cast %c1_i32 : i32 to index
    %c0_18 = arith.constant 0 : index
    %c0_19 = arith.constant 0 : index
    %22 = vector.load %arg7[%21, %c0_18, %c0_19] : memref<8x8x384xf32, #tpu.memory_space<vmem>>, vector<1x8x384xf32>
    %23 = vector.shape_cast %22 : vector<1x8x384xf32> to vector<8x384xf32>
    %24 = arith.truncf %20 : vector<8x384xf32> to vector<8x384xbf16>
    %cst_20 = arith.constant dense<0.000000e+00> : vector<8x384xf32>
    %25 = tpu.matmul %24, %12, %cst_20 {dimension_numbers = #tpu.dot_dimension_numbers<[1], [0], [0], [1], [0, 0, 1, 1], [], []>} : vector<8x384xbf16>, vector<384x384xbf16>, vector<8x384xf32> -> vector<8x384xf32>
    %26 = arith.addf %23, %25 : vector<8x384xf32>
    %27 = math.tanh %26 : vector<8x384xf32>
    %c2_i32 = arith.constant 2 : i32
    %28 = arith.index_cast %c2_i32 : i32 to index
    %c0_21 = arith.constant 0 : index
    %c0_22 = arith.constant 0 : index
    %29 = vector.load %arg7[%28, %c0_21, %c0_22] : memref<8x8x384xf32, #tpu.memory_space<vmem>>, vector<1x8x384xf32>
    %30 = vector.shape_cast %29 : vector<1x8x384xf32> to vector<8x384xf32>
    %31 = arith.truncf %27 : vector<8x384xf32> to vector<8x384xbf16>
    %cst_23 = arith.constant dense<0.000000e+00> : vector<8x384xf32>
    %32 = tpu.matmul %31, %12, %cst_23 {dimension_numbers = #tpu.dot_dimension_numbers<[1], [0], [0], [1], [0, 0, 1, 1], [], []>} : vector<8x384xbf16>, vector<384x384xbf16>, vector<8x384xf32> -> vector<8x384xf32>
    %33 = arith.addf %30, %32 : vector<8x384xf32>
    %34 = math.tanh %33 : vector<8x384xf32>
    %c3_i32 = arith.constant 3 : i32
    %35 = arith.index_cast %c3_i32 : i32 to index
    %c0_24 = arith.constant 0 : index
    %c0_25 = arith.constant 0 : index
    %36 = vector.load %arg7[%35, %c0_24, %c0_25] : memref<8x8x384xf32, #tpu.memory_space<vmem>>, vector<1x8x384xf32>
    %37 = vector.shape_cast %36 : vector<1x8x384xf32> to vector<8x384xf32>
    %38 = arith.truncf %34 : vector<8x384xf32> to vector<8x384xbf16>
    %cst_26 = arith.constant dense<0.000000e+00> : vector<8x384xf32>
    %39 = tpu.matmul %38, %12, %cst_26 {dimension_numbers = #tpu.dot_dimension_numbers<[1], [0], [0], [1], [0, 0, 1, 1], [], []>} : vector<8x384xbf16>, vector<384x384xbf16>, vector<8x384xf32> -> vector<8x384xf32>
    %40 = arith.addf %37, %39 : vector<8x384xf32>
    %41 = math.tanh %40 : vector<8x384xf32>
    %c4_i32 = arith.constant 4 : i32
    %42 = arith.index_cast %c4_i32 : i32 to index
    %c0_27 = arith.constant 0 : index
    %c0_28 = arith.constant 0 : index
    %43 = vector.load %arg7[%42, %c0_27, %c0_28] : memref<8x8x384xf32, #tpu.memory_space<vmem>>, vector<1x8x384xf32>
    %44 = vector.shape_cast %43 : vector<1x8x384xf32> to vector<8x384xf32>
    %45 = arith.truncf %41 : vector<8x384xf32> to vector<8x384xbf16>
    %cst_29 = arith.constant dense<0.000000e+00> : vector<8x384xf32>
    %46 = tpu.matmul %45, %12, %cst_29 {dimension_numbers = #tpu.dot_dimension_numbers<[1], [0], [0], [1], [0, 0, 1, 1], [], []>} : vector<8x384xbf16>, vector<384x384xbf16>, vector<8x384xf32> -> vector<8x384xf32>
    %47 = arith.addf %44, %46 : vector<8x384xf32>
    %48 = math.tanh %47 : vector<8x384xf32>
    %c5_i32 = arith.constant 5 : i32
    %49 = arith.index_cast %c5_i32 : i32 to index
    %c0_30 = arith.constant 0 : index
    %c0_31 = arith.constant 0 : index
    %50 = vector.load %arg7[%49, %c0_30, %c0_31] : memref<8x8x384xf32, #tpu.memory_space<vmem>>, vector<1x8x384xf32>
    %51 = vector.shape_cast %50 : vector<1x8x384xf32> to vector<8x384xf32>
    %52 = arith.truncf %48 : vector<8x384xf32> to vector<8x384xbf16>
    %cst_32 = arith.constant dense<0.000000e+00> : vector<8x384xf32>
    %53 = tpu.matmul %52, %12, %cst_32 {dimension_numbers = #tpu.dot_dimension_numbers<[1], [0], [0], [1], [0, 0, 1, 1], [], []>} : vector<8x384xbf16>, vector<384x384xbf16>, vector<8x384xf32> -> vector<8x384xf32>
    %54 = arith.addf %51, %53 : vector<8x384xf32>
    %55 = math.tanh %54 : vector<8x384xf32>
    %c6_i32 = arith.constant 6 : i32
    %56 = arith.index_cast %c6_i32 : i32 to index
    %c0_33 = arith.constant 0 : index
    %c0_34 = arith.constant 0 : index
    %57 = vector.load %arg7[%56, %c0_33, %c0_34] : memref<8x8x384xf32, #tpu.memory_space<vmem>>, vector<1x8x384xf32>
    %58 = vector.shape_cast %57 : vector<1x8x384xf32> to vector<8x384xf32>
    %59 = arith.truncf %55 : vector<8x384xf32> to vector<8x384xbf16>
    %cst_35 = arith.constant dense<0.000000e+00> : vector<8x384xf32>
    %60 = tpu.matmul %59, %12, %cst_35 {dimension_numbers = #tpu.dot_dimension_numbers<[1], [0], [0], [1], [0, 0, 1, 1], [], []>} : vector<8x384xbf16>, vector<384x384xbf16>, vector<8x384xf32> -> vector<8x384xf32>
    %61 = arith.addf %58, %60 : vector<8x384xf32>
    %62 = math.tanh %61 : vector<8x384xf32>
    %c7_i32 = arith.constant 7 : i32
    %63 = arith.index_cast %c7_i32 : i32 to index
    %c0_36 = arith.constant 0 : index
    %c0_37 = arith.constant 0 : index
    %64 = vector.load %arg7[%63, %c0_36, %c0_37] : memref<8x8x384xf32, #tpu.memory_space<vmem>>, vector<1x8x384xf32>
    %65 = vector.shape_cast %64 : vector<1x8x384xf32> to vector<8x384xf32>
    %66 = arith.truncf %62 : vector<8x384xf32> to vector<8x384xbf16>
    %cst_38 = arith.constant dense<0.000000e+00> : vector<8x384xf32>
    %67 = tpu.matmul %66, %12, %cst_38 {dimension_numbers = #tpu.dot_dimension_numbers<[1], [0], [0], [1], [0, 0, 1, 1], [], []>} : vector<8x384xbf16>, vector<384x384xbf16>, vector<8x384xf32> -> vector<8x384xf32>
    %68 = arith.addf %65, %67 : vector<8x384xf32>
    %69 = math.tanh %68 : vector<8x384xf32>
    %c8_i32 = arith.constant 8 : i32
    %c0_39 = arith.constant 0 : index
    %c0_40 = arith.constant 0 : index
    %70 = vector.load %arg6[%c0_39, %c0_40] : memref<8x384xf32, #tpu.memory_space<vmem>>, vector<8x384xf32>
    tpu.vector_store %arg6[%c0_39, %c0_40], %69 {strides = array<i32>} : memref<8x384xf32, #tpu.memory_space<vmem>>, vector<8x384xf32>,
    return
  }
  func.func @transform_0(%arg0: i32, %arg1: i32) -> (i32, i32, i32) {
    %c0_i32 = arith.constant 0 : i32
    %c0_i32_0 = arith.constant 0 : i32
    return %arg1, %arg0, %c0_i32 : i32, i32, i32
  }
  func.func @transform_1(%arg0: i32, %arg1: i32) -> (i32, i32) {
    %c0_i32 = arith.constant 0 : i32
    %c0_i32_0 = arith.constant 0 : i32
    %c0_i32_1 = arith.constant 0 : i32
    return %c0_i32, %c0_i32_0 : i32, i32
  }
  func.func @transform_2(%arg0: i32, %arg1: i32) -> (i32, i32) {
    %c0_i32 = arith.constant 0 : i32
    %c0_i32_0 = arith.constant 0 : i32
    %c0_i32_1 = arith.constant 0 : i32
    return %c0_i32, %c0_i32_0 : i32, i32
  }
  func.func @transform_3(%arg0: i32, %arg1: i32) -> (i32, i32) {
    %c0_i32 = arith.constant 0 : i32
    %c0_i32_0 = arith.constant 0 : i32
    %c0_i32_1 = arith.constant 0 : i32
    return %c0_i32, %c0_i32_0 : i32, i32
  }
  func.func @transform_4(%arg0: i32, %arg1: i32) -> (i32, i32) {
    %c0_i32 = arith.constant 0 : i32
    %c0_i32_0 = arith.constant 0 : i32
    return %arg0, %c0_i32 : i32, i32
  }
}

</mosaic_0001>

<llo_original>
// kernel: tpu_custom_call.1
$region0: #{tpu_custom_call.1}
  #allocation0 [shape = 'u32[]', space=smem, size = 0x4, offset = 0x4, fixed_abs, tag = 'smem constant byte address 0x4 - core index']
  #allocation1 [shape = 'u32[144,128]{1,0:T(1,128)}', space=vmem, size = 0x12000, scoped, tag = 'internal scratch']
  #allocation2 [shape = 'f32[8,8,384]{2,1,0:T(8,128)}', space=vmem, size = 0x18000, scoped, tag = 'scratch operand']
  %s0 = inlined_call_operand.hbm [shape: bf16[8,8,16], index: 0, kind: input, shape index: {}]
  %s1 = inlined_call_operand.hbm [shape: bf16[16,384], index: 1, kind: input, shape index: {}]
  %s2 = inlined_call_operand.hbm [shape: bf16[384,384], index: 2, kind: input, shape index: {}]
  %s3 = inlined_call_operand.vmem [shape: f32[1,384], index: 3, kind: input, shape index: {}]
  %s4 = inlined_call_operand.hbm [shape: f32[8,384], index: 4, kind: output, shape index: {}]
  %s5 = sld [smem:[#allocation0]]
  $region42: #{tpu_custom_call.1} parent=0
    _
  %s7 = ssub.s32 1, %s5
  %s8 = scalar_select 0, %s7, %s5
  $region1: #{tpu_custom_call.1} parent=0
    #allocation3 [shape = 'u8[16384]{0}', space=vmem, size = 0x4000, scoped, tag = 'input window, operand 0, single buffered']
    #allocation4 [shape = 's32[1]{0}', space=sflag, size = 0x4, scoped, tag = 'scoped memory for tpu_custom_call.1']
    #allocation5 [shape = 's32[1]{0}', space=sflag, size = 0x4, scoped, tag = 'scoped memory for tpu_custom_call.1']
    #allocation6 [shape = 'u8[12288]{0}', space=vmem, size = 0x3000, scoped, tag = 'input window, operand 1, single buffered']
    #allocation7 [shape = 's32[1]{0}', space=sflag, size = 0x4, scoped, tag = 'scoped memory for tpu_custom_call.1']
    #allocation8 [shape = 'u8[294912]{0}', space=vmem, size = 0x48000, scoped, tag = 'input window, operand 2, single buffered']
    #allocation9 [shape = 'u8[12288]{0}', space=vmem, size = 0x3000, scoped, tag = 'output window, operand 0, single buffered']
    %9 = vsyncpa [#allocation4], 0
    %10 = vsyncpa [#allocation7], 0
    %11 = vsyncpa [#allocation5], 0
    // Predicated region
    $region2: #{tpu_custom_call.1} parent=1 // pred_check
      _
    $region3: #{tpu_custom_call.1} parent=1 // pred_check_branch
      %13 = sbr.rel (0) target = $region5
    $region4: #{tpu_custom_call.1} parent=1 // pred_region
      %s15 = ssub.s32 512, 512
      %16 = vsyncadd [#allocation4], %s15
      %s17 = sshll.u32 [#allocation3], 4
      %s18 = int_to_ptr.vmem [resolvable:$true] %s17
      %23 = dma.hbm_to_vmem [thread:$0]  %s0, 512, %s18, [#allocation4], 64, 64, 4
    $region5: #{tpu_custom_call.1} parent=1 // pred_fallthru
      _
    // Predicated region
    $region6: #{tpu_custom_call.1} parent=1 // pred_check
      _
    $region7: #{tpu_custom_call.1} parent=1 // pred_check_branch
      %25 = sbr.rel (0) target = $region9
    $region8: #{tpu_custom_call.1} parent=1 // pred_region
      %s27 = ssub.s32 384, 384
      %28 = vsyncadd [#allocation7], %s27
      %s29 = sshll.u32 [#allocation6], 4
      %s30 = int_to_ptr.vmem [resolvable:$true] %s29
      %35 = dma.hbm_to_vmem [thread:$0]  %s1, 384, %s30, [#allocation7], 192, 192, 12
    $region9: #{tpu_custom_call.1} parent=1 // pred_fallthru
      _
    // Predicated region
    $region10: #{tpu_custom_call.1} parent=1 // pred_check
      _
    $region11: #{tpu_custom_call.1} parent=1 // pred_check_branch
      %37 = sbr.rel (0) target = $region13
    $region12: #{tpu_custom_call.1} parent=1 // pred_region
      %s39 = ssub.s32 9216, 9216
      %40 = vsyncadd [#allocation7], %s39
      %s41 = sshll.u32 [#allocation8], 4
      %s42 = int_to_ptr.vmem [resolvable:$true] %s41
      %47 = dma.hbm_to_vmem [thread:$0]  %s2, 9216, %s42, [#allocation7], 192, 192, 12
    $region13: #{tpu_custom_call.1} parent=1 // pred_fallthru
      _
    // Predicated region
    $region14: #{tpu_custom_call.1} parent=1 // pred_check
      _
    $region15: #{tpu_custom_call.1} parent=1 // pred_check_branch
      %49 = sbr.rel (0) target = $region17
    $region16: #{tpu_custom_call.1} parent=1 // pred_region
      _
    $region17: #{tpu_custom_call.1} parent=1 // pred_fallthru
      _
    // Predicated region
    $region18: #{tpu_custom_call.1} parent=1 // pred_check
      _
    $region19: #{tpu_custom_call.1} parent=1 // pred_check_branch
      %51 = sbr.rel (0) target = $region21
    $region20: #{tpu_custom_call.1} parent=1 // pred_region
      %52 = dma.done [#allocation4], 512
    $region21: #{tpu_custom_call.1} parent=1 // pred_fallthru
      _
    // Predicated region
    $region22: #{tpu_custom_call.1} parent=1 // pred_check
      _
    $region23: #{tpu_custom_call.1} parent=1 // pred_check_branch
      %54 = sbr.rel (0) target = $region25
    $region24: #{tpu_custom_call.1} parent=1 // pred_region
      %55 = dma.done [#allocation7], 384
    $region25: #{tpu_custom_call.1} parent=1 // pred_fallthru
      _
    // Predicated region
    $region26: #{tpu_custom_call.1} parent=1 // pred_check
      _
    $region27: #{tpu_custom_call.1} parent=1 // pred_check_branch
      %57 = sbr.rel (0) target = $region29
    $region28: #{tpu_custom_call.1} parent=1 // pred_region
      %58 = dma.done [#allocation7], 9216
    $region29: #{tpu_custom_call.1} parent=1 // pred_fallthru
      _
    %p60 = scmp.eq.s32.totalorder 0, 0
    // Predicated region
    $region30: #{tpu_custom_call.1} parent=1 // pred_check
      %p61 = pneg %p60
    $region31: #{tpu_custom_call.1} parent=1 // pred_check_branch
      %63 = sbr.rel (%p61) target = $region33
    $region32: #{tpu_custom_call.1} parent=1 // pred_region
      %64 = vst [vmem:[#allocation9] sm:$0xff] 0.0
      %65 = vst [vmem:[#allocation9 + $0x8] sm:$0xff] 0.0
      %66 = vst [vmem:[#allocation9 + $0x10] sm:$0xff] 0.0
    $region33: #{tpu_custom_call.1} parent=1 // pred_fallthru
      _
    %v67 = vld [vmem:[#allocation3] sm:$0xf]
    %v68 = vld [vmem:[#allocation3 + $0x4] sm:$0xf]
    %v69 = vld [vmem:[#allocation3 + $0x8] sm:$0xf]
    %v70 = vld [vmem:[#allocation3 + $0xc] sm:$0xf]
    %v71 = vld [vmem:[#allocation3 + $0x10] sm:$0xf]
    %v72 = vld [vmem:[#allocation3 + $0x14] sm:$0xf]
    %v73 = vld [vmem:[#allocation3 + $0x18] sm:$0xf]
    %v74 = vld [vmem:[#allocation3 + $0x1c] sm:$0xf]
    %v75 = vld [vmem:[#allocation6] sm:$0xff]
    %v76 = vld [vmem:[#allocation6 + $0x8] sm:$0xf]
    %v77 = vld [vmem:[#allocation6 + $0xc] sm:$0xff]
    %v78 = vld [vmem:[#allocation6 + $0x14] sm:$0xf]
    %v79 = vld [vmem:[%s3] sm:$0x7]
    %v81 = vlaneseq
    %v82 = vshrl.u32 %v81, 7
    %v83 = vsub.s32 0, %v82
    %v84 = vrot.slane %v79, %v83
    %v85 = vlaneseq
    %v86 = vshrl.u32 %v85, 7
    %v87 = vsub.s32 1, %v86
    %v88 = vrot.slane %v79, %v87
    %v89 = vlaneseq
    %v90 = vshrl.u32 %v89, 7
    %v91 = vsub.s32 2, %v90
    %v92 = vrot.slane %v79, %v91
    %v104 = vunpack.c.l.b16 %v67
    %v105 = vunpack.c.l.b16 %v68
    %v106 = vunpack.c.l.b16 %v69
    %v107 = vunpack.c.l.b16 %v70
    %v108 = vunpack.c.l.b16 %v71
    %v109 = vunpack.c.l.b16 %v72
    %v110 = vunpack.c.l.b16 %v73
    %v111 = vunpack.c.l.b16 %v74
    %v112 = vpack.c.b16 %v105, %v104
    %v113 = vpack.c.b16 %v107, %v106
    %v114 = vpack.c.b16 %v109, %v108
    %v115 = vpack.c.b16 %v111, %v110
    %v120 = vunpack.c.l.b16 %v75
    %v121 = vunpack.c.h.b16 %v75
    %v122 = vunpack.c.l.b16 %v76
    %v123 = vunpack.c.l.b16 %v77
    %v124 = vunpack.c.h.b16 %v77
    %v125 = vunpack.c.l.b16 %v78
    %v126 = vpack.c.b16 %v123, %v120
    %v127 = vpack.c.b16 %v124, %v121
    %v128 = vpack.c.b16 %v125, %v122
    %vm132 = vcmask 130048
    %v134 = vsel %vm132, %v112, 0
    %v137 = vsel %vm132, %v113, 0
    %v140 = vsel %vm132, %v114, 0
    %v143 = vsel %vm132, %v115, 0
    %145 = vmatprep.subr.bf16.mxu0 0
    %146 = vmatpush1.bf16.msra.mxu0 0
    %147 = vmatprep.subr.bf16.mxu0 0
    %148 = vmatpush1.bf16.msra.mxu0 0
    %149 = vmatprep.subr.bf16.mxu0 0
    %150 = vmatpush1.bf16.msra.mxu0 0
    %151 = vmatprep.subr.bf16.mxu0 0
    %152 = vmatpush1.bf16.msra.mxu0 0
    %153 = vmatprep.subr.bf16.mxu0 0
    %154 = vmatpush1.bf16.msra.mxu0 0
    %155 = vmatprep.subr.bf16.mxu0 0
    %156 = vmatpush1.bf16.msra.mxu0 0
    %157 = vmatprep.subr.bf16.mxu0 0
    %158 = vmatpush1.bf16.msra.mxu0 0
    %159 = vmatprep.subr.bf16.mxu0 %v127
    %160 = vmatpush1.bf16.msra.mxu0 %v126
    %161 = vmatprep.subr.bf16.mxu0 0
    %162 = vmatpush2.bf16.msra.mxu0 0
    %163 = vmatprep.subr.bf16.mxu0 0
    %164 = vmatpush2.bf16.msra.mxu0 0
    %165 = vmatprep.subr.bf16.mxu0 0
    %166 = vmatpush2.bf16.msra.mxu0 0
    %167 = vmatprep.subr.bf16.mxu0 0
    %168 = vmatpush2.bf16.msra.mxu0 0
    %169 = vmatprep.subr.bf16.mxu0 0
    %170 = vmatpush2.bf16.msra.mxu0 0
    %171 = vmatprep.subr.bf16.mxu0 0
    %172 = vmatpush2.bf16.msra.mxu0 0
    %173 = vmatprep.subr.bf16.mxu0 0
    %174 = vmatpush2.bf16.msra.mxu0 0
    %175 = vmatprep.subr.bf16.mxu0 0
    %176 = vmatpush2.bf16.msra.mxu0 0
    %177 = vmatprep.mubr.bf16.mxu0 0
    %178 = vmatmul.mubr.bf16.gmra.mxu0 %v134
    %v179 = vpop.f32.mrf.mxu0
    %v180 = vadd.f32 %v84, %v179
    %v181 = vpop.f32.mrf.mxu0
    %v182 = vadd.f32 %v88, %v181
    %v183 = vpop.f32.mrf.mxu0
    %v184 = vadd.f32 %v84, %v183
    %v185 = vpop.f32.mrf.mxu0
    %v186 = vadd.f32 %v88, %v185
    %187 = vmatprep.mubr.bf16.mxu0 0
    %188 = vmatmul.mubr.bf16.gmra.mxu0 %v137
    %v189 = vpop.f32.mrf.mxu0
    %v190 = vadd.f32 %v84, %v189
    %v191 = vpop.f32.mrf.mxu0
    %v192 = vadd.f32 %v88, %v191
    %v193 = vpop.f32.mrf.mxu0
    %v194 = vadd.f32 %v84, %v193
    %v195 = vpop.f32.mrf.mxu0
    %v196 = vadd.f32 %v88, %v195
    %197 = vmatprep.mubr.bf16.mxu0 0
    %198 = vmatmul.mubr.bf16.gmra.mxu0 %v140
    %v199 = vpop.f32.mrf.mxu0
    %v200 = vadd.f32 %v84, %v199
    %v201 = vpop.f32.mrf.mxu0
    %v202 = vadd.f32 %v88, %v201
    %v203 = vpop.f32.mrf.mxu0
    %v204 = vadd.f32 %v84, %v203
    %v205 = vpop.f32.mrf.mxu0
    %v206 = vadd.f32 %v88, %v205
    %207 = vmatprep.mubr.bf16.mxu0 0
    %208 = vmatmul.mubr.bf16.gmra.mxu0 %v143
    %v209 = vpop.f32.mrf.mxu0
    %v210 = vadd.f32 %v84, %v209
    %v211 = vpop.f32.mrf.mxu0
    %v212 = vadd.f32 %v88, %v211
    %v213 = vpop.f32.mrf.mxu0
    %v214 = vadd.f32 %v84, %v213
    %v215 = vpop.f32.mrf.mxu0
    %v216 = vadd.f32 %v88, %v215
    %217 = vdwg.mxu0
    %218 = vmatprep.subr.bf16.mxu0 0
    %219 = vmatpush1.bf16.msra.mxu0 0
    %220 = vmatprep.subr.bf16.mxu0 0
    %221 = vmatpush1.bf16.msra.mxu0 0
    %222 = vmatprep.subr.bf16.mxu0 0
    %223 = vmatpush1.bf16.msra.mxu0 0
    %224 = vmatprep.subr.bf16.mxu0 0
    %225 = vmatpush1.bf16.msra.mxu0 0
    %226 = vmatprep.subr.bf16.mxu0 0
    %227 = vmatpush1.bf16.msra.mxu0 0
    %228 = vmatprep.subr.bf16.mxu0 0
    %229 = vmatpush1.bf16.msra.mxu0 0
    %230 = vmatprep.subr.bf16.mxu0 0
    %231 = vmatpush1.bf16.msra.mxu0 0
    %232 = vmatprep.subr.bf16.mxu0 0
    %233 = vmatpush1.bf16.msra.mxu0 %v128
    %234 = vmatprep.subr.bf16.mxu0 0
    %235 = vmatpush2.bf16.msra.mxu0 0
    %236 = vmatprep.subr.bf16.mxu0 0
    %237 = vmatpush2.bf16.msra.mxu0 0
    %238 = vmatprep.subr.bf16.mxu0 0
    %239 = vmatpush2.bf16.msra.mxu0 0
    %240 = vmatprep.subr.bf16.mxu0 0
    %241 = vmatpush2.bf16.msra.mxu0 0
    %242 = vmatprep.subr.bf16.mxu0 0
    %243 = vmatpush2.bf16.msra.mxu0 0
    %244 = vmatprep.subr.bf16.mxu0 0
    %245 = vmatpush2.bf16.msra.mxu0 0
    %246 = vmatprep.subr.bf16.mxu0 0
    %247 = vmatpush2.bf16.msra.mxu0 0
    %248 = vmatprep.subr.bf16.mxu0 0
    %249 = vmatpush2.bf16.msra.mxu0 0
    %250 = vmatprep.mubr.bf16.mxu0 0
    %251 = vmatmul.mubr.bf16.gmra.mxu0 %v134
    %v252 = vpop.f32.mrf.mxu0
    %v253 = vadd.f32 %v92, %v252
    %v254 = vpop.f32.mrf.mxu0
    %v255 = vpop.f32.mrf.mxu0
    %v256 = vadd.f32 %v92, %v255
    %v257 = vpop.f32.mrf.mxu0
    %258 = vmatprep.mubr.bf16.mxu0 0
    %259 = vmatmul.mubr.bf16.gmra.mxu0 %v137
    %v260 = vpop.f32.mrf.mxu0
    %v261 = vadd.f32 %v92, %v260
    %v262 = vpop.f32.mrf.mxu0
    %v263 = vpop.f32.mrf.mxu0
    %v264 = vadd.f32 %v92, %v263
    %v265 = vpop.f32.mrf.mxu0
    %266 = vmatprep.mubr.bf16.mxu0 0
    %267 = vmatmul.mubr.bf16.gmra.mxu0 %v140
    %v268 = vpop.f32.mrf.mxu0
    %v269 = vadd.f32 %v92, %v268
    %v270 = vpop.f32.mrf.mxu0
    %v271 = vpop.f32.mrf.mxu0
    %v272 = vadd.f32 %v92, %v271
    %v273 = vpop.f32.mrf.mxu0
    %274 = vmatprep.mubr.bf16.mxu0 0
    %275 = vmatmul.mubr.bf16.gmra.mxu0 %v143
    %v276 = vpop.f32.mrf.mxu0
    %v277 = vadd.f32 %v92, %v276
    %v278 = vpop.f32.mrf.mxu0
    %v279 = vpop.f32.mrf.mxu0
    %v280 = vadd.f32 %v92, %v279
    %v281 = vpop.f32.mrf.mxu0
    %282 = vdwg.mxu0
    %283 = vst [vmem:[#allocation2] sm:$0xff] %v180
    %284 = vst [vmem:[#allocation2 + $0x8] sm:$0xff] %v182
    %285 = vst [vmem:[#allocation2 + $0x10] sm:$0xff] %v253
    %286 = vst [vmem:[#allocation2 + $0x18] sm:$0xff] %v184
    %287 = vst [vmem:[#allocation2 + $0x20] sm:$0xff] %v186
    %288 = vst [vmem:[#allocation2 + $0x28] sm:$0xff] %v256
    %289 = vst [vmem:[#allocation2 + $0x30] sm:$0xff] %v190
    %290 = vst [vmem:[#allocation2 + $0x38] sm:$0xff] %v192
    %291 = vst [vmem:[#allocation2 + $0x40] sm:$0xff] %v261
    %292 = vst [vmem:[#allocation2 + $0x48] sm:$0xff] %v194
    %293 = vst [vmem:[#allocation2 + $0x50] sm:$0xff] %v196
    %294 = vst [vmem:[#allocation2 + $0x58] sm:$0xff] %v264
    %295 = vst [vmem:[#allocation2 + $0x60] sm:$0xff] %v200
    %296 = vst [vmem:[#allocation2 + $0x68] sm:$0xff] %v202
    %297 = vst [vmem:[#allocation2 + $0x70] sm:$0xff] %v269
    %298 = vst [vmem:[#allocation2 + $0x78] sm:$0xff] %v204
    %299 = vst [vmem:[#allocation2 + $0x80] sm:$0xff] %v206
    %300 = vst [vmem:[#allocation2 + $0x88] sm:$0xff] %v272
    %301 = vst [vmem:[#allocation2 + $0x90] sm:$0xff] %v210
    %302 = vst [vmem:[#allocation2 + $0x98] sm:$0xff] %v212
    %303 = vst [vmem:[#allocation2 + $0xa0] sm:$0xff] %v277
    %304 = vst [vmem:[#allocation2 + $0xa8] sm:$0xff] %v214
    %305 = vst [vmem:[#allocation2 + $0xb0] sm:$0xff] %v216
    %306 = vst [vmem:[#allocation2 + $0xb8] sm:$0xff] %v280
    %v307 = vld [vmem:[#allocation8] sm:$0xff]
    %v308 = vld [vmem:[#allocation8 + $0x8] sm:$0xf]
    %v309 = vld [vmem:[#allocation8 + $0xc] sm:$0xff]
    %v310 = vld [vmem:[#allocation8 + $0x14] sm:$0xf]
    %v311 = vld [vmem:[#allocation8 + $0x18] sm:$0xff]
    %v312 = vld [vmem:[#allocation8 + $0x20] sm:$0xf]
    %v313 = vld [vmem:[#allocation8 + $0x24] sm:$0xff]
    %v314 = vld [vmem:[#allocation8 + $0x2c] sm:$0xf]
    %v315 = vld [vmem:[#allocation8 + $0x30] sm:$0xff]
    %v316 = vld [vmem:[#allocation8 + $0x38] sm:$0xf]
    %v317 = vld [vmem:[#allocation8 + $0x3c] sm:$0xff]
    %v318 = vld [vmem:[#allocation8 + $0x44] sm:$0xf]
    %v319 = vld [vmem:[#allocation8 + $0x48] sm:$0xff]
    %v320 = vld [vmem:[#allocation8 + $0x50] sm:$0xf]
    %v321 = vld [vmem:[#allocation8 + $0x54] sm:$0xff]
    %v322 = vld [vmem:[#allocation8 + $0x5c] sm:$0xf]
    %v323 = vld [vmem:[#allocation8 + $0x60] sm:$0xff]
    %v324 = vld [vmem:[#allocation8 + $0x68] sm:$0xf]
    %v325 = vld [vmem:[#allocation8 + $0x6c] sm:$0xff]
    %v326 = vld [vmem:[#allocation8 + $0x74] sm:$0xf]
    %v327 = vld [vmem:[#allocation8 + $0x78] sm:$0xff]
    %v328 = vld [vmem:[#allocation8 + $0x80] sm:$0xf]
    %v329 = vld [vmem:[#allocation8 + $0x84] sm:$0xff]
    %v330 = vld [vmem:[#allocation8 + $0x8c] sm:$0xf]
    %v331 = vld [vmem:[#allocation8 + $0x90] sm:$0xff]
    %v332 = vld [vmem:[#allocation8 + $0x98] sm:$0xf]
    %v333 = vld [vmem:[#allocation8 + $0x9c] sm:$0xff]
    %v334 = vld [vmem:[#allocation8 + $0xa4] sm:$0xf]
    %v335 = vld [vmem:[#allocation8 + $0xa8] sm:$0xff]
    %v336 = vld [vmem:[#allocation8 + $0xb0] sm:$0xf]
    %v337 = vld [vmem:[#allocation8 + $0xb4] sm:$0xff]
    %v338 = vld [vmem:[#allocation8 + $0xbc] sm:$0xf]
    %v339 = vld [vmem:[#allocation8 + $0xc0] sm:$0xff]
    %v340 = vld [vmem:[#allocation8 + $0xc8] sm:$0xf]
    %v341 = vld [vmem:[#allocation8 + $0xcc] sm:$0xff]
    %v342 = vld [vmem:[#allocation8 + $0xd4] sm:$0xf]
    %v343 = vld [vmem:[#allocation8 + $0xd8] sm:$0xff]
    %v344 = vld [vmem:[#allocation8 + $0xe0] sm:$0xf]
    %v345 = vld [vmem:[#allocation8 + $0xe4] sm:$0xff]
    %v346 = vld [vmem:[#allocation8 + $0xec] sm:$0xf]
    %v347 = vld [vmem:[#allocation8 + $0xf0] sm:$0xff]
    %v348 = vld [vmem:[#allocation8 + $0xf8] sm:$0xf]
    %v349 = vld [vmem:[#allocation8 + $0xfc] sm:$0xff]
    %v350 = vld [vmem:[#allocation8 + $0x104] sm:$0xf]
    %v351 = vld [vmem:[#allocation8 + $0x108] sm:$0xff]
    %v352 = vld [vmem:[#allocation8 + $0x110] sm:$0xf]
    %v353 = vld [vmem:[#allocation8 + $0x114] sm:$0xff]
    %v354 = vld [vmem:[#allocation8 + $0x11c] sm:$0xf]
    %v355 = vld [vmem:[#allocation8 + $0x120] sm:$0xff]
    %v356 = vld [vmem:[#allocation8 + $0x128] sm:$0xf]
    %v357 = vld [vmem:[#allocation8 + $0x12c] sm:$0xff]
    %v358 = vld [vmem:[#allocation8 + $0x134] sm:$0xf]
    %v359 = vld [vmem:[#allocation8 + $0x138] sm:$0xff]
    %v360 = vld [vmem:[#allocation8 + $0x140] sm:$0xf]
    %v361 = vld [vmem:[#allocation8 + $0x144] sm:$0xff]
    %v362 = vld [vmem:[#allocation8 + $0x14c] sm:$0xf]
    %v363 = vld [vmem:[#allocation8 + $0x150] sm:$0xff]
    %v364 = vld [vmem:[#allocation8 + $0x158] sm:$0xf]
    %v365 = vld [vmem:[#allocation8 + $0x15c] sm:$0xff]
    %v366 = vld [vmem:[#allocation8 + $0x164] sm:$0xf]
    %v367 = vld [vmem:[#allocation8 + $0x168] sm:$0xff]
    %v368 = vld [vmem:[#allocation8 + $0x170] sm:$0xf]
    %v369 = vld [vmem:[#allocation8 + $0x174] sm:$0xff]
    %v370 = vld [vmem:[#allocation8 + $0x17c] sm:$0xf]
    %v371 = vld [vmem:[#allocation8 + $0x180] sm:$0xff]
    %v372 = vld [vmem:[#allocation8 + $0x188] sm:$0xf]
    %v373 = vld [vmem:[#allocation8 + $0x18c] sm:$0xff]
    %v374 = vld [vmem:[#allocation8 + $0x194] sm:$0xf]
    %v375 = vld [vmem:[#allocation8 + $0x198] sm:$0xff]
    %v376 = vld [vmem:[#allocation8 + $0x1a0] sm:$0xf]
    %v377 = vld [vmem:[#allocation8 + $0x1a4] sm:$0xff]
    %v378 = vld [vmem:[#allocation8 + $0x1ac] sm:$0xf]
    %v379 = vld [vmem:[#allocation8 + $0x1b0] sm:$0xff]
    %v380 = vld [vmem:[#allocation8 + $0x1b8] sm:$0xf]
    %v381 = vld [vmem:[#allocation8 + $0x1bc] sm:$0xff]
    %v382 = vld [vmem:[#allocation8 + $0x1c4] sm:$0xf]
    %v383 = vld [vmem:[#allocation8 + $0x1c8] sm:$0xff]
    %v384 = vld [vmem:[#allocation8 + $0x1d0] sm:$0xf]
    %v385 = vld [vmem:[#allocation8 + $0x1d4] sm:$0xff]
    %v386 = vld [vmem:[#allocation8 + $0x1dc] sm:$0xf]
    %v387 = vld [vmem:[#allocation8 + $0x1e0] sm:$0xff]
    %v388 = vld [vmem:[#allocation8 + $0x1e8] sm:$0xf]
    %v389 = vld [vmem:[#allocation8 + $0x1ec] sm:$0xff]
    %v390 = vld [vmem:[#allocation8 + $0x1f4] sm:$0xf]
    %v391 = vld [vmem:[#allocation8 + $0x1f8] sm:$0xff]
    %v392 = vld [vmem:[#allocation8 + $0x200] sm:$0xf]
    %v393 = vld [vmem:[#allocation8 + $0x204] sm:$0xff]
    %v394 = vld [vmem:[#allocation8 + $0x20c] sm:$0xf]
    %v395 = vld [vmem:[#allocation8 + $0x210] sm:$0xff]
    %v396 = vld [vmem:[#allocation8 + $0x218] sm:$0xf]
    %v397 = vld [vmem:[#allocation8 + $0x21c] sm:$0xff]
    %v398 = vld [vmem:[#allocation8 + $0x224] sm:$0xf]
    %v399 = vld [vmem:[#allocation8 + $0x228] sm:$0xff]
    %v400 = vld [vmem:[#allocation8 + $0x230] sm:$0xf]
    %v401 = vld [vmem:[#allocation8 + $0x234] sm:$0xff]
    %v402 = vld [vmem:[#allocation8 + $0x23c] sm:$0xf]
    %v403 = vld [vmem:[#allocation9] sm:$0xff]
    %v404 = vld [vmem:[#allocation9 + $0x8] sm:$0xff]
    %v405 = vld [vmem:[#allocation9 + $0x10] sm:$0xff]
    %v406 = vld [vmem:[#allocation2] sm:$0xff]
    %v407 = vld [vmem:[#allocation2 + $0x8] sm:$0xff]
    %v408 = vld [vmem:[#allocation2 + $0x10] sm:$0xff]
    %v409 = vpack.c.bf16 %v403, %v403
    %v410 = vpack.c.bf16 %v404, %v404
    %v411 = vpack.c.bf16 %v405, %v405
    %v508 = vunpack.c.l.b16 %v307
    %v509 = vunpack.c.h.b16 %v307
    %v510 = vunpack.c.l.b16 %v308
    %v511 = vunpack.c.l.b16 %v309
    %v512 = vunpack.c.h.b16 %v309
    %v513 = vunpack.c.l.b16 %v310
    %v514 = vunpack.c.l.b16 %v311
    %v515 = vunpack.c.h.b16 %v311
    %v516 = vunpack.c.l.b16 %v312
    %v517 = vunpack.c.l.b16 %v313
    %v518 = vunpack.c.h.b16 %v313
    %v519 = vunpack.c.l.b16 %v314
    %v520 = vunpack.c.l.b16 %v315
    %v521 = vunpack.c.h.b16 %v315
    %v522 = vunpack.c.l.b16 %v316
    %v523 = vunpack.c.l.b16 %v317
    %v524 = vunpack.c.h.b16 %v317
    %v525 = vunpack.c.l.b16 %v318
    %v526 = vunpack.c.l.b16 %v319
    %v527 = vunpack.c.h.b16 %v319
    %v528 = vunpack.c.l.b16 %v320
    %v529 = vunpack.c.l.b16 %v321
    %v530 = vunpack.c.h.b16 %v321
    %v531 = vunpack.c.l.b16 %v322
    %v532 = vunpack.c.l.b16 %v323
    %v533 = vunpack.c.h.b16 %v323
    %v534 = vunpack.c.l.b16 %v324
    %v535 = vunpack.c.l.b16 %v325
    %v536 = vunpack.c.h.b16 %v325
    %v537 = vunpack.c.l.b16 %v326
    %v538 = vunpack.c.l.b16 %v327
    %v539 = vunpack.c.h.b16 %v327
    %v540 = vunpack.c.l.b16 %v328
    %v541 = vunpack.c.l.b16 %v329
    %v542 = vunpack.c.h.b16 %v329
    %v543 = vunpack.c.l.b16 %v330
    %v544 = vunpack.c.l.b16 %v331
    %v545 = vunpack.c.h.b16 %v331
    %v546 = vunpack.c.l.b16 %v332
    %v547 = vunpack.c.l.b16 %v333
    %v548 = vunpack.c.h.b16 %v333
    %v549 = vunpack.c.l.b16 %v334
    %v550 = vunpack.c.l.b16 %v335
    %v551 = vunpack.c.h.b16 %v335
    %v552 = vunpack.c.l.b16 %v336
    %v553 = vunpack.c.l.b16 %v337
    %v554 = vunpack.c.h.b16 %v337
    %v555 = vunpack.c.l.b16 %v338
    %v556 = vunpack.c.l.b16 %v339
    %v557 = vunpack.c.h.b16 %v339
    %v558 = vunpack.c.l.b16 %v340
    %v559 = vunpack.c.l.b16 %v341
    %v560 = vunpack.c.h.b16 %v341
    %v561 = vunpack.c.l.b16 %v342
    %v562 = vunpack.c.l.b16 %v343
    %v563 = vunpack.c.h.b16 %v343
    %v564 = vunpack.c.l.b16 %v344
    %v565 = vunpack.c.l.b16 %v345
    %v566 = vunpack.c.h.b16 %v345
    %v567 = vunpack.c.l.b16 %v346
    %v568 = vunpack.c.l.b16 %v347
    %v569 = vunpack.c.h.b16 %v347
    %v570 = vunpack.c.l.b16 %v348
    %v571 = vunpack.c.l.b16 %v349
    %v572 = vunpack.c.h.b16 %v349
    %v573 = vunpack.c.l.b16 %v350
    %v574 = vunpack.c.l.b16 %v351
    %v575 = vunpack.c.h.b16 %v351
    %v576 = vunpack.c.l.b16 %v352
    %v577 = vunpack.c.l.b16 %v353
    %v578 = vunpack.c.h.b16 %v353
    %v579 = vunpack.c.l.b16 %v354
    %v580 = vunpack.c.l.b16 %v355
    %v581 = vunpack.c.h.b16 %v355
    %v582 = vunpack.c.l.b16 %v356
    %v583 = vunpack.c.l.b16 %v357
    %v584 = vunpack.c.h.b16 %v357
    %v585 = vunpack.c.l.b16 %v358
    %v586 = vunpack.c.l.b16 %v359
    %v587 = vunpack.c.h.b16 %v359
    %v588 = vunpack.c.l.b16 %v360
    %v589 = vunpack.c.l.b16 %v361
    %v590 = vunpack.c.h.b16 %v361
    %v591 = vunpack.c.l.b16 %v362
    %v592 = vunpack.c.l.b16 %v363
    %v593 = vunpack.c.h.b16 %v363
    %v594 = vunpack.c.l.b16 %v364
    %v595 = vunpack.c.l.b16 %v365
    %v596 = vunpack.c.h.b16 %v365
    %v597 = vunpack.c.l.b16 %v366
    %v598 = vunpack.c.l.b16 %v367
    %v599 = vunpack.c.h.b16 %v367
    %v600 = vunpack.c.l.b16 %v368
    %v601 = vunpack.c.l.b16 %v369
    %v602 = vunpack.c.h.b16 %v369
    %v603 = vunpack.c.l.b16 %v370
    %v604 = vunpack.c.l.b16 %v371
    %v605 = vunpack.c.h.b16 %v371
    %v606 = vunpack.c.l.b16 %v372
    %v607 = vunpack.c.l.b16 %v373
    %v608 = vunpack.c.h.b16 %v373
    %v609 = vunpack.c.l.b16 %v374
    %v610 = vunpack.c.l.b16 %v375
    %v611 = vunpack.c.h.b16 %v375
    %v612 = vunpack.c.l.b16 %v376
    %v613 = vunpack.c.l.b16 %v377
    %v614 = vunpack.c.h.b16 %v377
    %v615 = vunpack.c.l.b16 %v378
    %v616 = vunpack.c.l.b16 %v379
    %v617 = vunpack.c.h.b16 %v379
    %v618 = vunpack.c.l.b16 %v380
    %v619 = vunpack.c.l.b16 %v381
    %v620 = vunpack.c.h.b16 %v381
    %v621 = vunpack.c.l.b16 %v382
    %v622 = vunpack.c.l.b16 %v383
    %v623 = vunpack.c.h.b16 %v383
    %v624 = vunpack.c.l.b16 %v384
    %v625 = vunpack.c.l.b16 %v385
    %v626 = vunpack.c.h.b16 %v385
    %v627 = vunpack.c.l.b16 %v386
    %v628 = vunpack.c.l.b16 %v387
    %v629 = vunpack.c.h.b16 %v387
    %v630 = vunpack.c.l.b16 %v388
    %v631 = vunpack.c.l.b16 %v389
    %v632 = vunpack.c.h.b16 %v389
    %v633 = vunpack.c.l.b16 %v390
    %v634 = vunpack.c.l.b16 %v391
    %v635 = vunpack.c.h.b16 %v391
    %v636 = vunpack.c.l.b16 %v392
    %v637 = vunpack.c.l.b16 %v393
    %v638 = vunpack.c.h.b16 %v393
    %v639 = vunpack.c.l.b16 %v394
    %v640 = vunpack.c.l.b16 %v395
    %v641 = vunpack.c.h.b16 %v395
    %v642 = vunpack.c.l.b16 %v396
    %v643 = vunpack.c.l.b16 %v397
    %v644 = vunpack.c.h.b16 %v397
    %v645 = vunpack.c.l.b16 %v398
    %v646 = vunpack.c.l.b16 %v399
    %v647 = vunpack.c.h.b16 %v399
    %v648 = vunpack.c.l.b16 %v400
    %v649 = vunpack.c.l.b16 %v401
    %v650 = vunpack.c.h.b16 %v401
    %v651 = vunpack.c.l.b16 %v402
    %v652 = vpack.c.b16 %v511, %v508
    %v653 = vpack.c.b16 %v512, %v509
    %v654 = vpack.c.b16 %v513, %v510
    %v655 = vpack.c.b16 %v517, %v514
    %v656 = vpack.c.b16 %v518, %v515
    %v657 = vpack.c.b16 %v519, %v516
    %v658 = vpack.c.b16 %v523, %v520
    %v659 = vpack.c.b16 %v524, %v521
    %v660 = vpack.c.b16 %v525, %v522
    %v661 = vpack.c.b16 %v529, %v526
    %v662 = vpack.c.b16 %v530, %v527
    %v663 = vpack.c.b16 %v531, %v528
    %v664 = vpack.c.b16 %v535, %v532
    %v665 = vpack.c.b16 %v536, %v533
    %v666 = vpack.c.b16 %v537, %v534
    %v667 = vpack.c.b16 %v541, %v538
    %v668 = vpack.c.b16 %v542, %v539
    %v669 = vpack.c.b16 %v543, %v540
    %v670 = vpack.c.b16 %v547, %v544
    %v671 = vpack.c.b16 %v548, %v545
    %v672 = vpack.c.b16 %v549, %v546
    %v673 = vpack.c.b16 %v553, %v550
    %v674 = vpack.c.b16 %v554, %v551
    %v675 = vpack.c.b16 %v555, %v552
    %v676 = vpack.c.b16 %v559, %v556
    %v677 = vpack.c.b16 %v560, %v557
    %v678 = vpack.c.b16 %v561, %v558
    %v679 = vpack.c.b16 %v565, %v562
    %v680 = vpack.c.b16 %v566, %v563
    %v681 = vpack.c.b16 %v567, %v564
    %v682 = vpack.c.b16 %v571, %v568
    %v683 = vpack.c.b16 %v572, %v569
    %v684 = vpack.c.b16 %v573, %v570
    %v685 = vpack.c.b16 %v577, %v574
    %v686 = vpack.c.b16 %v578, %v575
    %v687 = vpack.c.b16 %v579, %v576
    %v688 = vpack.c.b16 %v583, %v580
    %v689 = vpack.c.b16 %v584, %v581
    %v690 = vpack.c.b16 %v585, %v582
    %v691 = vpack.c.b16 %v589, %v586
    %v692 = vpack.c.b16 %v590, %v587
    %v693 = vpack.c.b16 %v591, %v588
    %v694 = vpack.c.b16 %v595, %v592
    %v695 = vpack.c.b16 %v596, %v593
    %v696 = vpack.c.b16 %v597, %v594
    %v697 = vpack.c.b16 %v601, %v598
    %v698 = vpack.c.b16 %v602, %v599
    %v699 = vpack.c.b16 %v603, %v600
    %v700 = vpack.c.b16 %v607, %v604
    %v701 = vpack.c.b16 %v608, %v605
    %v702 = vpack.c.b16 %v609, %v606
    %v703 = vpack.c.b16 %v613, %v610
    %v704 = vpack.c.b16 %v614, %v611
    %v705 = vpack.c.b16 %v615, %v612
    %v706 = vpack.c.b16 %v619, %v616
    %v707 = vpack.c.b16 %v620, %v617
    %v708 = vpack.c.b16 %v621, %v618
    %v709 = vpack.c.b16 %v625, %v622
    %v710 = vpack.c.b16 %v626, %v623
    %v711 = vpack.c.b16 %v627, %v624
    %v712 = vpack.c.b16 %v631, %v628
    %v713 = vpack.c.b16 %v632, %v629
    %v714 = vpack.c.b16 %v633, %v630
    %v715 = vpack.c.b16 %v637, %v634
    %v716 = vpack.c.b16 %v638, %v635
    %v717 = vpack.c.b16 %v639, %v636
    %v718 = vpack.c.b16 %v643, %v640
    %v719 = vpack.c.b16 %v644, %v641
    %v720 = vpack.c.b16 %v645, %v642
    %v721 = vpack.c.b16 %v649, %v646
    %v722 = vpack.c.b16 %v650, %v647
    %v723 = vpack.c.b16 %v651, %v648
    %796 = vmatprep.subr.bf16.mxu0 %v674
    %797 = vmatpush1.bf16.msra.mxu0 %v673
    %798 = vmatprep.subr.bf16.mxu0 %v671
    %799 = vmatpush1.bf16.msra.mxu0 %v670
    %800 = vmatprep.subr.bf16.mxu0 %v668
    %801 = vmatpush1.bf16.msra.mxu0 %v667
    %802 = vmatprep.subr.bf16.mxu0 %v665
    %803 = vmatpush1.bf16.msra.mxu0 %v664
    %804 = vmatprep.subr.bf16.mxu0 %v662
    %805 = vmatpush1.bf16.msra.mxu0 %v661
    %806 = vmatprep.subr.bf16.mxu0 %v659
    %807 = vmatpush1.bf16.msra.mxu0 %v658
    %808 = vmatprep.subr.bf16.mxu0 %v656
    %809 = vmatpush1.bf16.msra.mxu0 %v655
    %810 = vmatprep.subr.bf16.mxu0 %v653
    %811 = vmatpush1.bf16.msra.mxu0 %v652
    %812 = vmatprep.subr.bf16.mxu0 %v698
    %813 = vmatpush2.bf16.msra.mxu0 %v697
    %814 = vmatprep.subr.bf16.mxu0 %v695
    %815 = vmatpush2.bf16.msra.mxu0 %v694
    %816 = vmatprep.subr.bf16.mxu0 %v692
    %817 = vmatpush2.bf16.msra.mxu0 %v691
    %818 = vmatprep.subr.bf16.mxu0 %v689
    %819 = vmatpush2.bf16.msra.mxu0 %v688
    %820 = vmatprep.subr.bf16.mxu0 %v686
    %821 = vmatpush2.bf16.msra.mxu0 %v685
    %822 = vmatprep.subr.bf16.mxu0 %v683
    %823 = vmatpush2.bf16.msra.mxu0 %v682
    %824 = vmatprep.subr.bf16.mxu0 %v680
    %825 = vmatpush2.bf16.msra.mxu0 %v679
    %826 = vmatprep.subr.bf16.mxu0 %v677
    %827 = vmatpush2.bf16.msra.mxu0 %v676
    %828 = vmatprep.mubr.bf16.mxu0 %v410
    %829 = vmatmul.mubr.bf16.gmra.mxu0 %v409
    %v830 = vpop.f32.mrf.mxu0
    %v831 = vadd.f32 0.0, %v830
    %v832 = vpop.f32.mrf.mxu0
    %v833 = vadd.f32 0.0, %v832
    %v834 = vpop.f32.mrf.mxu0
    %v835 = vpop.f32.mrf.mxu0
    %836 = vdwg.mxu0
    %837 = vmatprep.subr.bf16.mxu0 %v722
    %838 = vmatpush1.bf16.msra.mxu0 %v721
    %839 = vmatprep.subr.bf16.mxu0 %v719
    %840 = vmatpush1.bf16.msra.mxu0 %v718
    %841 = vmatprep.subr.bf16.mxu0 %v716
    %842 = vmatpush1.bf16.msra.mxu0 %v715
    %843 = vmatprep.subr.bf16.mxu0 %v713
    %844 = vmatpush1.bf16.msra.mxu0 %v712
    %845 = vmatprep.subr.bf16.mxu0 %v710
    %846 = vmatpush1.bf16.msra.mxu0 %v709
    %847 = vmatprep.subr.bf16.mxu0 %v707
    %848 = vmatpush1.bf16.msra.mxu0 %v706
    %849 = vmatprep.subr.bf16.mxu0 %v704
    %850 = vmatpush1.bf16.msra.mxu0 %v703
    %851 = vmatprep.subr.bf16.mxu0 %v701
    %852 = vmatpush1.bf16.msra.mxu0 %v700
    %853 = vmatprep.subr.bf16.mxu0 0
    %854 = vmatpush2.bf16.msra.mxu0 0
    %855 = vmatprep.subr.bf16.mxu0 0
    %856 = vmatpush2.bf16.msra.mxu0 0
    %857 = vmatprep.subr.bf16.mxu0 0
    %858 = vmatpush2.bf16.msra.mxu0 0
    %859 = vmatprep.subr.bf16.mxu0 0
    %860 = vmatpush2.bf16.msra.mxu0 0
    %861 = vmatprep.subr.bf16.mxu0 0
    %862 = vmatpush2.bf16.msra.mxu0 0
    %863 = vmatprep.subr.bf16.mxu0 0
    %864 = vmatpush2.bf16.msra.mxu0 0
    %865 = vmatprep.subr.bf16.mxu0 0
    %866 = vmatpush2.bf16.msra.mxu0 0
    %867 = vmatprep.subr.bf16.mxu0 0
    %868 = vmatpush2.bf16.msra.mxu0 0
    %869 = vmatprep.mubr.bf16.mxu0 0
    %870 = vmatmul.mubr.bf16.gmra.mxu0 %v411
    %v871 = vpop.f32.mrf.mxu0
    %v872 = vadd.f32 %v831, %v871
    %v873 = vpop.f32.mrf.mxu0
    %v874 = vadd.f32 %v833, %v873
    %v875 = vpop.f32.mrf.mxu0
    %v876 = vpop.f32.mrf.mxu0
    %877 = vdwg.mxu0
    %878 = vmatprep.subr.bf16.mxu0 0
    %879 = vmatpush1.bf16.msra.mxu0 %v675
    %880 = vmatprep.subr.bf16.mxu0 0
    %881 = vmatpush1.bf16.msra.mxu0 %v672
    %882 = vmatprep.subr.bf16.mxu0 0
    %883 = vmatpush1.bf16.msra.mxu0 %v669
    %884 = vmatprep.subr.bf16.mxu0 0
    %885 = vmatpush1.bf16.msra.mxu0 %v666
    %886 = vmatprep.subr.bf16.mxu0 0
    %887 = vmatpush1.bf16.msra.mxu0 %v663
    %888 = vmatprep.subr.bf16.mxu0 0
    %889 = vmatpush1.bf16.msra.mxu0 %v660
    %890 = vmatprep.subr.bf16.mxu0 0
    %891 = vmatpush1.bf16.msra.mxu0 %v657
    %892 = vmatprep.subr.bf16.mxu0 0
    %893 = vmatpush1.bf16.msra.mxu0 %v654
    %894 = vmatprep.subr.bf16.mxu0 0
    %895 = vmatpush2.bf16.msra.mxu0 %v699
    %896 = vmatprep.subr.bf16.mxu0 0
    %897 = vmatpush2.bf16.msra.mxu0 %v696
    %898 = vmatprep.subr.bf16.mxu0 0
    %899 = vmatpush2.bf16.msra.mxu0 %v693
    %900 = vmatprep.subr.bf16.mxu0 0
    %901 = vmatpush2.bf16.msra.mxu0 %v690
    %902 = vmatprep.subr.bf16.mxu0 0
    %903 = vmatpush2.bf16.msra.mxu0 %v687
    %904 = vmatprep.subr.bf16.mxu0 0
    %905 = vmatpush2.bf16.msra.mxu0 %v684
    %906 = vmatprep.subr.bf16.mxu0 0
    %907 = vmatpush2.bf16.msra.mxu0 %v681
    %908 = vmatprep.subr.bf16.mxu0 0
    %909 = vmatpush2.bf16.msra.mxu0 %v678
    %910 = vmatprep.mubr.bf16.mxu0 %v410
    %911 = vmatmul.mubr.bf16.gmra.mxu0 %v409
    %v912 = vpop.f32.mrf.mxu0
    %v913 = vadd.f32 0.0, %v912
    %v914 = vpop.f32.mrf.mxu0
    %v915 = vpop.f32.mrf.mxu0
    %v916 = vpop.f32.mrf.mxu0
    %917 = vdwg.mxu0
    %918 = vmatprep.subr.bf16.mxu0 0
    %919 = vmatpush1.bf16.msra.mxu0 %v723
    %920 = vmatprep.subr.bf16.mxu0 0
    %921 = vmatpush1.bf16.msra.mxu0 %v720
    %922 = vmatprep.subr.bf16.mxu0 0
    %923 = vmatpush1.bf16.msra.mxu0 %v717
    %924 = vmatprep.subr.bf16.mxu0 0
    %925 = vmatpush1.bf16.msra.mxu0 %v714
    %926 = vmatprep.subr.bf16.mxu0 0
    %927 = vmatpush1.bf16.msra.mxu0 %v711
    %928 = vmatprep.subr.bf16.mxu0 0
    %929 = vmatpush1.bf16.msra.mxu0 %v708
    %930 = vmatprep.subr.bf16.mxu0 0
    %931 = vmatpush1.bf16.msra.mxu0 %v705
    %932 = vmatprep.subr.bf16.mxu0 0
    %933 = vmatpush1.bf16.msra.mxu0 %v702
    %934 = vmatprep.subr.bf16.mxu0 0
    %935 = vmatpush2.bf16.msra.mxu0 0
    %936 = vmatprep.subr.bf16.mxu0 0
    %937 = vmatpush2.bf16.msra.mxu0 0
    %938 = vmatprep.subr.bf16.mxu0 0
    %939 = vmatpush2.bf16.msra.mxu0 0
    %940 = vmatprep.subr.bf16.mxu0 0
    %941 = vmatpush2.bf16.msra.mxu0 0
    %942 = vmatprep.subr.bf16.mxu0 0
    %943 = vmatpush2.bf16.msra.mxu0 0
    %944 = vmatprep.subr.bf16.mxu0 0
    %945 = vmatpush2.bf16.msra.mxu0 0
    %946 = vmatprep.subr.bf16.mxu0 0
    %947 = vmatpush2.bf16.msra.mxu0 0
    %948 = vmatprep.subr.bf16.mxu0 0
    %949 = vmatpush2.bf16.msra.mxu0 0
    %950 = vmatprep.mubr.bf16.mxu0 0
    %951 = vmatmul.mubr.bf16.gmra.mxu0 %v411
    %v952 = vpop.f32.mrf.mxu0
    %v953 = vadd.f32 %v913, %v952
    %v954 = vpop.f32.mrf.mxu0
    %v955 = vpop.f32.mrf.mxu0
    %v956 = vpop.f32.mrf.mxu0
    %957 = vdwg.mxu0
    %v958 = vadd.f32 %v406, %v872
    %v959 = vadd.f32 %v407, %v874
    %v960 = vadd.f32 %v408, %v953
    %v961 = vtanh.pop %v958
    %v962 = vtanh.pop %v959
    %v963 = vtanh.pop %v960
    %s964 = scalar_lea.vmem [#allocation2], 24
    %v965 = vld [vmem:[%s964] sm:$0xff]
    %v966 = vld [vmem:[%s964 + $0x8] sm:$0xff]
    %v967 = vld [vmem:[%s964 + $0x10] sm:$0xff]
    %v968 = vpack.c.bf16 %v961, %v961
    %v969 = vpack.c.bf16 %v962, %v962
    %v970 = vpack.c.bf16 %v963, %v963
    %971 = vmatprep.subr.bf16.mxu0 %v674
    %972 = vmatpush1.bf16.msra.mxu0 %v673
    %973 = vmatprep.subr.bf16.mxu0 %v671
    %974 = vmatpush1.bf16.msra.mxu0 %v670
    %975 = vmatprep.subr.bf16.mxu0 %v668
    %976 = vmatpush1.bf16.msra.mxu0 %v667
    %977 = vmatprep.subr.bf16.mxu0 %v665
    %978 = vmatpush1.bf16.msra.mxu0 %v664
    %979 = vmatprep.subr.bf16.mxu0 %v662
    %980 = vmatpush1.bf16.msra.mxu0 %v661
    %981 = vmatprep.subr.bf16.mxu0 %v659
    %982 = vmatpush1.bf16.msra.mxu0 %v658
    %983 = vmatprep.subr.bf16.mxu0 %v656
    %984 = vmatpush1.bf16.msra.mxu0 %v655
    %985 = vmatprep.subr.bf16.mxu0 %v653
    %986 = vmatpush1.bf16.msra.mxu0 %v652
    %987 = vmatprep.subr.bf16.mxu0 %v698
    %988 = vmatpush2.bf16.msra.mxu0 %v697
    %989 = vmatprep.subr.bf16.mxu0 %v695
    %990 = vmatpush2.bf16.msra.mxu0 %v694
    %991 = vmatprep.subr.bf16.mxu0 %v692
    %992 = vmatpush2.bf16.msra.mxu0 %v691
    %993 = vmatprep.subr.bf16.mxu0 %v689
    %994 = vmatpush2.bf16.msra.mxu0 %v688
    %995 = vmatprep.subr.bf16.mxu0 %v686
    %996 = vmatpush2.bf16.msra.mxu0 %v685
    %997 = vmatprep.subr.bf16.mxu0 %v683
    %998 = vmatpush2.bf16.msra.mxu0 %v682
    %999 = vmatprep.subr.bf16.mxu0 %v680
    %1000 = vmatpush2.bf16.msra.mxu0 %v679
    %1001 = vmatprep.subr.bf16.mxu0 %v677
    %1002 = vmatpush2.bf16.msra.mxu0 %v676
    %1003 = vmatprep.mubr.bf16.mxu0 %v969
    %1004 = vmatmul.mubr.bf16.gmra.mxu0 %v968
    %v1005 = vpop.f32.mrf.mxu0
    %v1006 = vadd.f32 0.0, %v1005
    %v1007 = vpop.f32.mrf.mxu0
    %v1008 = vadd.f32 0.0, %v1007
    %v1009 = vpop.f32.mrf.mxu0
    %v1010 = vpop.f32.mrf.mxu0
    %1011 = vdwg.mxu0
    %1012 = vmatprep.subr.bf16.mxu0 %v722
    %1013 = vmatpush1.bf16.msra.mxu0 %v721
    %1014 = vmatprep.subr.bf16.mxu0 %v719
    %1015 = vmatpush1.bf16.msra.mxu0 %v718
    %1016 = vmatprep.subr.bf16.mxu0 %v716
    %1017 = vmatpush1.bf16.msra.mxu0 %v715
    %1018 = vmatprep.subr.bf16.mxu0 %v713
    %1019 = vmatpush1.bf16.msra.mxu0 %v712
    %1020 = vmatprep.subr.bf16.mxu0 %v710
    %1021 = vmatpush1.bf16.msra.mxu0 %v709
    %1022 = vmatprep.subr.bf16.mxu0 %v707
    %1023 = vmatpush1.bf16.msra.mxu0 %v706
    %1024 = vmatprep.subr.bf16.mxu0 %v704
    %1025 = vmatpush1.bf16.msra.mxu0 %v703
    %1026 = vmatprep.subr.bf16.mxu0 %v701
    %1027 = vmatpush1.bf16.msra.mxu0 %v700
    %1028 = vmatprep.subr.bf16.mxu0 0
    %1029 = vmatpush2.bf16.msra.mxu0 0
    %1030 = vmatprep.subr.bf16.mxu0 0
    %1031 = vmatpush2.bf16.msra.mxu0 0
    %1032 = vmatprep.subr.bf16.mxu0 0
    %1033 = vmatpush2.bf16.msra.mxu0 0
    %1034 = vmatprep.subr.bf16.mxu0 0
    %1035 = vmatpush2.bf16.msra.mxu0 0
    %1036 = vmatprep.subr.bf16.mxu0 0
    %1037 = vmatpush2.bf16.msra.mxu0 0
    %1038 = vmatprep.subr.bf16.mxu0 0
    %1039 = vmatpush2.bf16.msra.mxu0 0
    %1040 = vmatprep.subr.bf16.mxu0 0
    %1041 = vmatpush2.bf16.msra.mxu0 0
    %1042 = vmatprep.subr.bf16.mxu0 0
    %1043 = vmatpush2.bf16.msra.mxu0 0
    %1044 = vmatprep.mubr.bf16.mxu0 0
    %1045 = vmatmul.mubr.bf16.gmra.mxu0 %v970
    %v1046 = vpop.f32.mrf.mxu0
    %v1047 = vadd.f32 %v1006, %v1046
    %v1048 = vpop.f32.mrf.mxu0
    %v1049 = vadd.f32 %v1008, %v1048
    %v1050 = vpop.f32.mrf.mxu0
    %v1051 = vpop.f32.mrf.mxu0
    %1052 = vdwg.mxu0
    %1053 = vmatprep.subr.bf16.mxu0 0
    %1054 = vmatpush1.bf16.msra.mxu0 %v675
    %1055 = vmatprep.subr.bf16.mxu0 0
    %1056 = vmatpush1.bf16.msra.mxu0 %v672
    %1057 = vmatprep.subr.bf16.mxu0 0
    %1058 = vmatpush1.bf16.msra.mxu0 %v669
    %1059 = vmatprep.subr.bf16.mxu0 0
    %1060 = vmatpush1.bf16.msra.mxu0 %v666
    %1061 = vmatprep.subr.bf16.mxu0 0
    %1062 = vmatpush1.bf16.msra.mxu0 %v663
    %1063 = vmatprep.subr.bf16.mxu0 0
    %1064 = vmatpush1.bf16.msra.mxu0 %v660
    %1065 = vmatprep.subr.bf16.mxu0 0
    %1066 = vmatpush1.bf16.msra.mxu0 %v657
    %1067 = vmatprep.subr.bf16.mxu0 0
    %1068 = vmatpush1.bf16.msra.mxu0 %v654
    %1069 = vmatprep.subr.bf16.mxu0 0
    %1070 = vmatpush2.bf16.msra.mxu0 %v699
    %1071 = vmatprep.subr.bf16.mxu0 0
    %1072 = vmatpush2.bf16.msra.mxu0 %v696
    %1073 = vmatprep.subr.bf16.mxu0 0
    %1074 = vmatpush2.bf16.msra.mxu0 %v693
    %1075 = vmatprep.subr.bf16.mxu0 0
    %1076 = vmatpush2.bf16.msra.mxu0 %v690
    %1077 = vmatprep.subr.bf16.mxu0 0
    %1078 = vmatpush2.bf16.msra.mxu0 %v687
    %1079 = vmatprep.subr.bf16.mxu0 0
    %1080 = vmatpush2.bf16.msra.mxu0 %v684
    %1081 = vmatprep.subr.bf16.mxu0 0
    %1082 = vmatpush2.bf16.msra.mxu0 %v681
    %1083 = vmatprep.subr.bf16.mxu0 0
    %1084 = vmatpush2.bf16.msra.mxu0 %v678
    %1085 = vmatprep.mubr.bf16.mxu0 %v969
    %1086 = vmatmul.mubr.bf16.gmra.mxu0 %v968
    %v1087 = vpop.f32.mrf.mxu0
    %v1088 = vadd.f32 0.0, %v1087
    %v1089 = vpop.f32.mrf.mxu0
    %v1090 = vpop.f32.mrf.mxu0
    %v1091 = vpop.f32.mrf.mxu0
    %1092 = vdwg.mxu0
    %1093 = vmatprep.subr.bf16.mxu0 0
    %1094 = vmatpush1.bf16.msra.mxu0 %v723
    %1095 = vmatprep.subr.bf16.mxu0 0
    %1096 = vmatpush1.bf16.msra.mxu0 %v720
    %1097 = vmatprep.subr.bf16.mxu0 0
    %1098 = vmatpush1.bf16.msra.mxu0 %v717
    %1099 = vmatprep.subr.bf16.mxu0 0
    %1100 = vmatpush1.bf16.msra.mxu0 %v714
    %1101 = vmatprep.subr.bf16.mxu0 0
    %1102 = vmatpush1.bf16.msra.mxu0 %v711
    %1103 = vmatprep.subr.bf16.mxu0 0
    %1104 = vmatpush1.bf16.msra.mxu0 %v708
    %1105 = vmatprep.subr.bf16.mxu0 0
    %1106 = vmatpush1.bf16.msra.mxu0 %v705
    %1107 = vmatprep.subr.bf16.mxu0 0
    %1108 = vmatpush1.bf16.msra.mxu0 %v702
    %1109 = vmatprep.subr.bf16.mxu0 0
    %1110 = vmatpush2.bf16.msra.mxu0 0
    %1111 = vmatprep.subr.bf16.mxu0 0
    %1112 = vmatpush2.bf16.msra.mxu0 0
    %1113 = vmatprep.subr.bf16.mxu0 0
    %1114 = vmatpush2.bf16.msra.mxu0 0
    %1115 = vmatprep.subr.bf16.mxu0 0
    %1116 = vmatpush2.bf16.msra.mxu0 0
    %1117 = vmatprep.subr.bf16.mxu0 0
    %1118 = vmatpush2.bf16.msra.mxu0 0
    %1119 = vmatprep.subr.bf16.mxu0 0
    %1120 = vmatpush2.bf16.msra.mxu0 0
    %1121 = vmatprep.subr.bf16.mxu0 0
    %1122 = vmatpush2.bf16.msra.mxu0 0
    %1123 = vmatprep.subr.bf16.mxu0 0
    %1124 = vmatpush2.bf16.msra.mxu0 0
    %1125 = vmatprep.mubr.bf16.mxu0 0
    %1126 = vmatmul.mubr.bf16.gmra.mxu0 %v970
    %v1127 = vpop.f32.mrf.mxu0
    %v1128 = vadd.f32 %v1088, %v1127
    %v1129 = vpop.f32.mrf.mxu0
    %v1130 = vpop.f32.mrf.mxu0
    %v1131 = vpop.f32.mrf.mxu0
    %1132 = vdwg.mxu0
    %v1133 = vadd.f32 %v965, %v1047
    %v1134 = vadd.f32 %v966, %v1049
    %v1135 = vadd.f32 %v967, %v1128
    %v1136 = vtanh.pop %v1133
    %v1137 = vtanh.pop %v1134
    %v1138 = vtanh.pop %v1135
    %s1139 = scalar_lea.vmem [#allocation2], 48
    %v1140 = vld [vmem:[%s1139] sm:$0xff]
    %v1141 = vld [vmem:[%s1139 + $0x8] sm:$0xff]
    %v1142 = vld [vmem:[%s1139 + $0x10] sm:$0xff]
    %v1143 = vpack.c.bf16 %v1136, %v1136
    %v1144 = vpack.c.bf16 %v1137, %v1137
    %v1145 = vpack.c.bf16 %v1138, %v1138
    %1146 = vmatprep.subr.bf16.mxu0 %v674
    %1147 = vmatpush1.bf16.msra.mxu0 %v673
    %1148 = vmatprep.subr.bf16.mxu0 %v671
    %1149 = vmatpush1.bf16.msra.mxu0 %v670
    %1150 = vmatprep.subr.bf16.mxu0 %v668
    %1151 = vmatpush1.bf16.msra.mxu0 %v667
    %1152 = vmatprep.subr.bf16.mxu0 %v665
    %1153 = vmatpush1.bf16.msra.mxu0 %v664
    %1154 = vmatprep.subr.bf16.mxu0 %v662
    %1155 = vmatpush1.bf16.msra.mxu0 %v661
    %1156 = vmatprep.subr.bf16.mxu0 %v659
    %1157 = vmatpush1.bf16.msra.mxu0 %v658
    %1158 = vmatprep.subr.bf16.mxu0 %v656
    %1159 = vmatpush1.bf16.msra.mxu0 %v655
    %1160 = vmatprep.subr.bf16.mxu0 %v653
    %1161 = vmatpush1.bf16.msra.mxu0 %v652
    %1162 = vmatprep.subr.bf16.mxu0 %v698
    %1163 = vmatpush2.bf16.msra.mxu0 %v697
    %1164 = vmatprep.subr.bf16.mxu0 %v695
    %1165 = vmatpush2.bf16.msra.mxu0 %v694
    %1166 = vmatprep.subr.bf16.mxu0 %v692
    %1167 = vmatpush2.bf16.msra.mxu0 %v691
    %1168 = vmatprep.subr.bf16.mxu0 %v689
    %1169 = vmatpush2.bf16.msra.mxu0 %v688
    %1170 = vmatprep.subr.bf16.mxu0 %v686
    %1171 = vmatpush2.bf16.msra.mxu0 %v685
    %1172 = vmatprep.subr.bf16.mxu0 %v683
    %1173 = vmatpush2.bf16.msra.mxu0 %v682
    %1174 = vmatprep.subr.bf16.mxu0 %v680
    %1175 = vmatpush2.bf16.msra.mxu0 %v679
    %1176 = vmatprep.subr.bf16.mxu0 %v677
    %1177 = vmatpush2.bf16.msra.mxu0 %v676
    %1178 = vmatprep.mubr.bf16.mxu0 %v1144
    %1179 = vmatmul.mubr.bf16.gmra.mxu0 %v1143
    %v1180 = vpop.f32.mrf.mxu0
    %v1181 = vadd.f32 0.0, %v1180
    %v1182 = vpop.f32.mrf.mxu0
    %v1183 = vadd.f32 0.0, %v1182
    %v1184 = vpop.f32.mrf.mxu0
    %v1185 = vpop.f32.mrf.mxu0
    %1186 = vdwg.mxu0
    %1187 = vmatprep.subr.bf16.mxu0 %v722
    %1188 = vmatpush1.bf16.msra.mxu0 %v721
    %1189 = vmatprep.subr.bf16.mxu0 %v719
    %1190 = vmatpush1.bf16.msra.mxu0 %v718
    %1191 = vmatprep.subr.bf16.mxu0 %v716
    %1192 = vmatpush1.bf16.msra.mxu0 %v715
    %1193 = vmatprep.subr.bf16.mxu0 %v713
    %1194 = vmatpush1.bf16.msra.mxu0 %v712
    %1195 = vmatprep.subr.bf16.mxu0 %v710
    %1196 = vmatpush1.bf16.msra.mxu0 %v709
    %1197 = vmatprep.subr.bf16.mxu0 %v707
    %1198 = vmatpush1.bf16.msra.mxu0 %v706
    %1199 = vmatprep.subr.bf16.mxu0 %v704
    %1200 = vmatpush1.bf16.msra.mxu0 %v703
    %1201 = vmatprep.subr.bf16.mxu0 %v701
    %1202 = vmatpush1.bf16.msra.mxu0 %v700
    %1203 = vmatprep.subr.bf16.mxu0 0
    %1204 = vmatpush2.bf16.msra.mxu0 0
    %1205 = vmatprep.subr.bf16.mxu0 0
    %1206 = vmatpush2.bf16.msra.mxu0 0
    %1207 = vmatprep.subr.bf16.mxu0 0
    %1208 = vmatpush2.bf16.msra.mxu0 0
    %1209 = vmatprep.subr.bf16.mxu0 0
    %1210 = vmatpush2.bf16.msra.mxu0 0
    %1211 = vmatprep.subr.bf16.mxu0 0
    %1212 = vmatpush2.bf16.msra.mxu0 0
    %1213 = vmatprep.subr.bf16.mxu0 0
    %1214 = vmatpush2.bf16.msra.mxu0 0
    %1215 = vmatprep.subr.bf16.mxu0 0
    %1216 = vmatpush2.bf16.msra.mxu0 0
    %1217 = vmatprep.subr.bf16.mxu0 0
    %1218 = vmatpush2.bf16.msra.mxu0 0
    %1219 = vmatprep.mubr.bf16.mxu0 0
    %1220 = vmatmul.mubr.bf16.gmra.mxu0 %v1145
    %v1221 = vpop.f32.mrf.mxu0
    %v1222 = vadd.f32 %v1181, %v1221
    %v1223 = vpop.f32.mrf.mxu0
    %v1224 = vadd.f32 %v1183, %v1223
    %v1225 = vpop.f32.mrf.mxu0
    %v1226 = vpop.f32.mrf.mxu0
    %1227 = vdwg.mxu0
    %1228 = vmatprep.subr.bf16.mxu0 0
    %1229 = vmatpush1.bf16.msra.mxu0 %v675
    %1230 = vmatprep.subr.bf16.mxu0 0
    %1231 = vmatpush1.bf16.msra.mxu0 %v672
    %1232 = vmatprep.subr.bf16.mxu0 0
    %1233 = vmatpush1.bf16.msra.mxu0 %v669
    %1234 = vmatprep.subr.bf16.mxu0 0
    %1235 = vmatpush1.bf16.msra.mxu0 %v666
    %1236 = vmatprep.subr.bf16.mxu0 0
    %1237 = vmatpush1.bf16.msra.mxu0 %v663
    %1238 = vmatprep.subr.bf16.mxu0 0
    %1239 = vmatpush1.bf16.msra.mxu0 %v660
    %1240 = vmatprep.subr.bf16.mxu0 0
    %1241 = vmatpush1.bf16.msra.mxu0 %v657
    %1242 = vmatprep.subr.bf16.mxu0 0
    %1243 = vmatpush1.bf16.msra.mxu0 %v654
    %1244 = vmatprep.subr.bf16.mxu0 0
    %1245 = vmatpush2.bf16.msra.mxu0 %v699
    %1246 = vmatprep.subr.bf16.mxu0 0
    %1247 = vmatpush2.bf16.msra.mxu0 %v696
    %1248 = vmatprep.subr.bf16.mxu0 0
    %1249 = vmatpush2.bf16.msra.mxu0 %v693
    %1250 = vmatprep.subr.bf16.mxu0 0
    %1251 = vmatpush2.bf16.msra.mxu0 %v690
    %1252 = vmatprep.subr.bf16.mxu0 0
    %1253 = vmatpush2.bf16.msra.mxu0 %v687
    %1254 = vmatprep.subr.bf16.mxu0 0
    %1255 = vmatpush2.bf16.msra.mxu0 %v684
    %1256 = vmatprep.subr.bf16.mxu0 0
    %1257 = vmatpush2.bf16.msra.mxu0 %v681
    %1258 = vmatprep.subr.bf16.mxu0 0
    %1259 = vmatpush2.bf16.msra.mxu0 %v678
    %1260 = vmatprep.mubr.bf16.mxu0 %v1144
    %1261 = vmatmul.mubr.bf16.gmra.mxu0 %v1143
    %v1262 = vpop.f32.mrf.mxu0
    %v1263 = vadd.f32 0.0, %v1262
    %v1264 = vpop.f32.mrf.mxu0
    %v1265 = vpop.f32.mrf.mxu0
    %v1266 = vpop.f32.mrf.mxu0
    %1267 = vdwg.mxu0
    %1268 = vmatprep.subr.bf16.mxu0 0
    %1269 = vmatpush1.bf16.msra.mxu0 %v723
    %1270 = vmatprep.subr.bf16.mxu0 0
    %1271 = vmatpush1.bf16.msra.mxu0 %v720
    %1272 = vmatprep.subr.bf16.mxu0 0
    %1273 = vmatpush1.bf16.msra.mxu0 %v717
    %1274 = vmatprep.subr.bf16.mxu0 0
    %1275 = vmatpush1.bf16.msra.mxu0 %v714
    %1276 = vmatprep.subr.bf16.mxu0 0
    %1277 = vmatpush1.bf16.msra.mxu0 %v711
    %1278 = vmatprep.subr.bf16.mxu0 0
    %1279 = vmatpush1.bf16.msra.mxu0 %v708
    %1280 = vmatprep.subr.bf16.mxu0 0
    %1281 = vmatpush1.bf16.msra.mxu0 %v705
    %1282 = vmatprep.subr.bf16.mxu0 0
    %1283 = vmatpush1.bf16.msra.mxu0 %v702
    %1284 = vmatprep.subr.bf16.mxu0 0
    %1285 = vmatpush2.bf16.msra.mxu0 0
    %1286 = vmatprep.subr.bf16.mxu0 0
    %1287 = vmatpush2.bf16.msra.mxu0 0
    %1288 = vmatprep.subr.bf16.mxu0 0
    %1289 = vmatpush2.bf16.msra.mxu0 0
    %1290 = vmatprep.subr.bf16.mxu0 0
    %1291 = vmatpush2.bf16.msra.mxu0 0
    %1292 = vmatprep.subr.bf16.mxu0 0
    %1293 = vmatpush2.bf16.msra.mxu0 0
    %1294 = vmatprep.subr.bf16.mxu0 0
    %1295 = vmatpush2.bf16.msra.mxu0 0
    %1296 = vmatprep.subr.bf16.mxu0 0
    %1297 = vmatpush2.bf16.msra.mxu0 0
    %1298 = vmatprep.subr.bf16.mxu0 0
    %1299 = vmatpush2.bf16.msra.mxu0 0
    %1300 = vmatprep.mubr.bf16.mxu0 0
    %1301 = vmatmul.mubr.bf16.gmra.mxu0 %v1145
    %v1302 = vpop.f32.mrf.mxu0
    %v1303 = vadd.f32 %v1263, %v1302
    %v1304 = vpop.f32.mrf.mxu0
    %v1305 = vpop.f32.mrf.mxu0
    %v1306 = vpop.f32.mrf.mxu0
    %1307 = vdwg.mxu0
    %v1308 = vadd.f32 %v1140, %v1222
    %v1309 = vadd.f32 %v1141, %v1224
    %v1310 = vadd.f32 %v1142, %v1303
    %v1311 = vtanh.pop %v1308
    %v1312 = vtanh.pop %v1309
    %v1313 = vtanh.pop %v1310
    %s1314 = scalar_lea.vmem [#allocation2], 72
    %v1315 = vld [vmem:[%s1314] sm:$0xff]
    %v1316 = vld [vmem:[%s1314 + $0x8] sm:$0xff]
    %v1317 = vld [vmem:[%s1314 + $0x10] sm:$0xff]
    %v1318 = vpack.c.bf16 %v1311, %v1311
    %v1319 = vpack.c.bf16 %v1312, %v1312
    %v1320 = vpack.c.bf16 %v1313, %v1313
    %1321 = vmatprep.subr.bf16.mxu0 %v674
    %1322 = vmatpush1.bf16.msra.mxu0 %v673
    %1323 = vmatprep.subr.bf16.mxu0 %v671
    %1324 = vmatpush1.bf16.msra.mxu0 %v670
    %1325 = vmatprep.subr.bf16.mxu0 %v668
    %1326 = vmatpush1.bf16.msra.mxu0 %v667
    %1327 = vmatprep.subr.bf16.mxu0 %v665
    %1328 = vmatpush1.bf16.msra.mxu0 %v664
    %1329 = vmatprep.subr.bf16.mxu0 %v662
    %1330 = vmatpush1.bf16.msra.mxu0 %v661
    %1331 = vmatprep.subr.bf16.mxu0 %v659
    %1332 = vmatpush1.bf16.msra.mxu0 %v658
    %1333 = vmatprep.subr.bf16.mxu0 %v656
    %1334 = vmatpush1.bf16.msra.mxu0 %v655
    %1335 = vmatprep.subr.bf16.mxu0 %v653
    %1336 = vmatpush1.bf16.msra.mxu0 %v652
    %1337 = vmatprep.subr.bf16.mxu0 %v698
    %1338 = vmatpush2.bf16.msra.mxu0 %v697
    %1339 = vmatprep.subr.bf16.mxu0 %v695
    %1340 = vmatpush2.bf16.msra.mxu0 %v694
    %1341 = vmatprep.subr.bf16.mxu0 %v692
    %1342 = vmatpush2.bf16.msra.mxu0 %v691
    %1343 = vmatprep.subr.bf16.mxu0 %v689
    %1344 = vmatpush2.bf16.msra.mxu0 %v688
    %1345 = vmatprep.subr.bf16.mxu0 %v686
    %1346 = vmatpush2.bf16.msra.mxu0 %v685
    %1347 = vmatprep.subr.bf16.mxu0 %v683
    %1348 = vmatpush2.bf16.msra.mxu0 %v682
    %1349 = vmatprep.subr.bf16.mxu0 %v680
    %1350 = vmatpush2.bf16.msra.mxu0 %v679
    %1351 = vmatprep.subr.bf16.mxu0 %v677
    %1352 = vmatpush2.bf16.msra.mxu0 %v676
    %1353 = vmatprep.mubr.bf16.mxu0 %v1319
    %1354 = vmatmul.mubr.bf16.gmra.mxu0 %v1318
    %v1355 = vpop.f32.mrf.mxu0
    %v1356 = vadd.f32 0.0, %v1355
    %v1357 = vpop.f32.mrf.mxu0
    %v1358 = vadd.f32 0.0, %v1357
    %v1359 = vpop.f32.mrf.mxu0
    %v1360 = vpop.f32.mrf.mxu0
    %1361 = vdwg.mxu0
    %1362 = vmatprep.subr.bf16.mxu0 %v722
    %1363 = vmatpush1.bf16.msra.mxu0 %v721
    %1364 = vmatprep.subr.bf16.mxu0 %v719
    %1365 = vmatpush1.bf16.msra.mxu0 %v718
    %1366 = vmatprep.subr.bf16.mxu0 %v716
    %1367 = vmatpush1.bf16.msra.mxu0 %v715
    %1368 = vmatprep.subr.bf16.mxu0 %v713
    %1369 = vmatpush1.bf16.msra.mxu0 %v712
    %1370 = vmatprep.subr.bf16.mxu0 %v710
    %1371 = vmatpush1.bf16.msra.mxu0 %v709
    %1372 = vmatprep.subr.bf16.mxu0 %v707
    %1373 = vmatpush1.bf16.msra.mxu0 %v706
    %1374 = vmatprep.subr.bf16.mxu0 %v704
    %1375 = vmatpush1.bf16.msra.mxu0 %v703
    %1376 = vmatprep.subr.bf16.mxu0 %v701
    %1377 = vmatpush1.bf16.msra.mxu0 %v700
    %1378 = vmatprep.subr.bf16.mxu0 0
    %1379 = vmatpush2.bf16.msra.mxu0 0
    %1380 = vmatprep.subr.bf16.mxu0 0
    %1381 = vmatpush2.bf16.msra.mxu0 0
    %1382 = vmatprep.subr.bf16.mxu0 0
    %1383 = vmatpush2.bf16.msra.mxu0 0
    %1384 = vmatprep.subr.bf16.mxu0 0
    %1385 = vmatpush2.bf16.msra.mxu0 0
    %1386 = vmatprep.subr.bf16.mxu0 0
    %1387 = vmatpush2.bf16.msra.mxu0 0
    %1388 = vmatprep.subr.bf16.mxu0 0
    %1389 = vmatpush2.bf16.msra.mxu0 0
    %1390 = vmatprep.subr.bf16.mxu0 0
    %1391 = vmatpush2.bf16.msra.mxu0 0
    %1392 = vmatprep.subr.bf16.mxu0 0
    %1393 = vmatpush2.bf16.msra.mxu0 0
    %1394 = vmatprep.mubr.bf16.mxu0 0
    %1395 = vmatmul.mubr.bf16.gmra.mxu0 %v1320
    %v1396 = vpop.f32.mrf.mxu0
    %v1397 = vadd.f32 %v1356, %v1396
    %v1398 = vpop.f32.mrf.mxu0
    %v1399 = vadd.f32 %v1358, %v1398
    %v1400 = vpop.f32.mrf.mxu0
    %v1401 = vpop.f32.mrf.mxu0
    %1402 = vdwg.mxu0
    %1403 = vmatprep.subr.bf16.mxu0 0
    %1404 = vmatpush1.bf16.msra.mxu0 %v675
    %1405 = vmatprep.subr.bf16.mxu0 0
    %1406 = vmatpush1.bf16.msra.mxu0 %v672
    %1407 = vmatprep.subr.bf16.mxu0 0
    %1408 = vmatpush1.bf16.msra.mxu0 %v669
    %1409 = vmatprep.subr.bf16.mxu0 0
    %1410 = vmatpush1.bf16.msra.mxu0 %v666
    %1411 = vmatprep.subr.bf16.mxu0 0
    %1412 = vmatpush1.bf16.msra.mxu0 %v663
    %1413 = vmatprep.subr.bf16.mxu0 0
    %1414 = vmatpush1.bf16.msra.mxu0 %v660
    %1415 = vmatprep.subr.bf16.mxu0 0
    %1416 = vmatpush1.bf16.msra.mxu0 %v657
    %1417 = vmatprep.subr.bf16.mxu0 0
    %1418 = vmatpush1.bf16.msra.mxu0 %v654
    %1419 = vmatprep.subr.bf16.mxu0 0
    %1420 = vmatpush2.bf16.msra.mxu0 %v699
    %1421 = vmatprep.subr.bf16.mxu0 0
    %1422 = vmatpush2.bf16.msra.mxu0 %v696
    %1423 = vmatprep.subr.bf16.mxu0 0
    %1424 = vmatpush2.bf16.msra.mxu0 %v693
    %1425 = vmatprep.subr.bf16.mxu0 0
    %1426 = vmatpush2.bf16.msra.mxu0 %v690
    %1427 = vmatprep.subr.bf16.mxu0 0
    %1428 = vmatpush2.bf16.msra.mxu0 %v687
    %1429 = vmatprep.subr.bf16.mxu0 0
    %1430 = vmatpush2.bf16.msra.mxu0 %v684
    %1431 = vmatprep.subr.bf16.mxu0 0
    %1432 = vmatpush2.bf16.msra.mxu0 %v681
    %1433 = vmatprep.subr.bf16.mxu0 0
    %1434 = vmatpush2.bf16.msra.mxu0 %v678
    %1435 = vmatprep.mubr.bf16.mxu0 %v1319
    %1436 = vmatmul.mubr.bf16.gmra.mxu0 %v1318
    %v1437 = vpop.f32.mrf.mxu0
    %v1438 = vadd.f32 0.0, %v1437
    %v1439 = vpop.f32.mrf.mxu0
    %v1440 = vpop.f32.mrf.mxu0
    %v1441 = vpop.f32.mrf.mxu0
    %1442 = vdwg.mxu0
    %1443 = vmatprep.subr.bf16.mxu0 0
    %1444 = vmatpush1.bf16.msra.mxu0 %v723
    %1445 = vmatprep.subr.bf16.mxu0 0
    %1446 = vmatpush1.bf16.msra.mxu0 %v720
    %1447 = vmatprep.subr.bf16.mxu0 0
    %1448 = vmatpush1.bf16.msra.mxu0 %v717
    %1449 = vmatprep.subr.bf16.mxu0 0
    %1450 = vmatpush1.bf16.msra.mxu0 %v714
    %1451 = vmatprep.subr.bf16.mxu0 0
    %1452 = vmatpush1.bf16.msra.mxu0 %v711
    %1453 = vmatprep.subr.bf16.mxu0 0
    %1454 = vmatpush1.bf16.msra.mxu0 %v708
    %1455 = vmatprep.subr.bf16.mxu0 0
    %1456 = vmatpush1.bf16.msra.mxu0 %v705
    %1457 = vmatprep.subr.bf16.mxu0 0
    %1458 = vmatpush1.bf16.msra.mxu0 %v702
    %1459 = vmatprep.subr.bf16.mxu0 0
    %1460 = vmatpush2.bf16.msra.mxu0 0
    %1461 = vmatprep.subr.bf16.mxu0 0
    %1462 = vmatpush2.bf16.msra.mxu0 0
    %1463 = vmatprep.subr.bf16.mxu0 0
    %1464 = vmatpush2.bf16.msra.mxu0 0
    %1465 = vmatprep.subr.bf16.mxu0 0
    %1466 = vmatpush2.bf16.msra.mxu0 0
    %1467 = vmatprep.subr.bf16.mxu0 0
    %1468 = vmatpush2.bf16.msra.mxu0 0
    %1469 = vmatprep.subr.bf16.mxu0 0
    %1470 = vmatpush2.bf16.msra.mxu0 0
    %1471 = vmatprep.subr.bf16.mxu0 0
    %1472 = vmatpush2.bf16.msra.mxu0 0
    %1473 = vmatprep.subr.bf16.mxu0 0
    %1474 = vmatpush2.bf16.msra.mxu0 0
    %1475 = vmatprep.mubr.bf16.mxu0 0
    %1476 = vmatmul.mubr.bf16.gmra.mxu0 %v1320
    %v1477 = vpop.f32.mrf.mxu0
    %v1478 = vadd.f32 %v1438, %v1477
    %v1479 = vpop.f32.mrf.mxu0
    %v1480 = vpop.f32.mrf.mxu0
    %v1481 = vpop.f32.mrf.mxu0
    %1482 = vdwg.mxu0
    %v1483 = vadd.f32 %v1315, %v1397
    %v1484 = vadd.f32 %v1316, %v1399
    %v1485 = vadd.f32 %v1317, %v1478
    %v1486 = vtanh.pop %v1483
    %v1487 = vtanh.pop %v1484
    %v1488 = vtanh.pop %v1485
    %s1489 = scalar_lea.vmem [#allocation2], 96
    %v1490 = vld [vmem:[%s1489] sm:$0xff]
    %v1491 = vld [vmem:[%s1489 + $0x8] sm:$0xff]
    %v1492 = vld [vmem:[%s1489 + $0x10] sm:$0xff]
    %v1493 = vpack.c.bf16 %v1486, %v1486
    %v1494 = vpack.c.bf16 %v1487, %v1487
    %v1495 = vpack.c.bf16 %v1488, %v1488
    %1496 = vmatprep.subr.bf16.mxu0 %v674
    %1497 = vmatpush1.bf16.msra.mxu0 %v673
    %1498 = vmatprep.subr.bf16.mxu0 %v671
    %1499 = vmatpush1.bf16.msra.mxu0 %v670
    %1500 = vmatprep.subr.bf16.mxu0 %v668
    %1501 = vmatpush1.bf16.msra.mxu0 %v667
    %1502 = vmatprep.subr.bf16.mxu0 %v665
    %1503 = vmatpush1.bf16.msra.mxu0 %v664
    %1504 = vmatprep.subr.bf16.mxu0 %v662
    %1505 = vmatpush1.bf16.msra.mxu0 %v661
    %1506 = vmatprep.subr.bf16.mxu0 %v659
    %1507 = vmatpush1.bf16.msra.mxu0 %v658
    %1508 = vmatprep.subr.bf16.mxu0 %v656
    %1509 = vmatpush1.bf16.msra.mxu0 %v655
    %1510 = vmatprep.subr.bf16.mxu0 %v653
    %1511 = vmatpush1.bf16.msra.mxu0 %v652
    %1512 = vmatprep.subr.bf16.mxu0 %v698
    %1513 = vmatpush2.bf16.msra.mxu0 %v697
    %1514 = vmatprep.subr.bf16.mxu0 %v695
    %1515 = vmatpush2.bf16.msra.mxu0 %v694
    %1516 = vmatprep.subr.bf16.mxu0 %v692
    %1517 = vmatpush2.bf16.msra.mxu0 %v691
    %1518 = vmatprep.subr.bf16.mxu0 %v689
    %1519 = vmatpush2.bf16.msra.mxu0 %v688
    %1520 = vmatprep.subr.bf16.mxu0 %v686
    %1521 = vmatpush2.bf16.msra.mxu0 %v685
    %1522 = vmatprep.subr.bf16.mxu0 %v683
    %1523 = vmatpush2.bf16.msra.mxu0 %v682
    %1524 = vmatprep.subr.bf16.mxu0 %v680
    %1525 = vmatpush2.bf16.msra.mxu0 %v679
    %1526 = vmatprep.subr.bf16.mxu0 %v677
    %1527 = vmatpush2.bf16.msra.mxu0 %v676
    %1528 = vmatprep.mubr.bf16.mxu0 %v1494
    %1529 = vmatmul.mubr.bf16.gmra.mxu0 %v1493
    %v1530 = vpop.f32.mrf.mxu0
    %v1531 = vadd.f32 0.0, %v1530
    %v1532 = vpop.f32.mrf.mxu0
    %v1533 = vadd.f32 0.0, %v1532
    %v1534 = vpop.f32.mrf.mxu0
    %v1535 = vpop.f32.mrf.mxu0
    %1536 = vdwg.mxu0
    %1537 = vmatprep.subr.bf16.mxu0 %v722
    %1538 = vmatpush1.bf16.msra.mxu0 %v721
    %1539 = vmatprep.subr.bf16.mxu0 %v719
    %1540 = vmatpush1.bf16.msra.mxu0 %v718
    %1541 = vmatprep.subr.bf16.mxu0 %v716
    %1542 = vmatpush1.bf16.msra.mxu0 %v715
    %1543 = vmatprep.subr.bf16.mxu0 %v713
    %1544 = vmatpush1.bf16.msra.mxu0 %v712
    %1545 = vmatprep.subr.bf16.mxu0 %v710
    %1546 = vmatpush1.bf16.msra.mxu0 %v709
    %1547 = vmatprep.subr.bf16.mxu0 %v707
    %1548 = vmatpush1.bf16.msra.mxu0 %v706
    %1549 = vmatprep.subr.bf16.mxu0 %v704
    %1550 = vmatpush1.bf16.msra.mxu0 %v703
    %1551 = vmatprep.subr.bf16.mxu0 %v701
    %1552 = vmatpush1.bf16.msra.mxu0 %v700
    %1553 = vmatprep.subr.bf16.mxu0 0
    %1554 = vmatpush2.bf16.msra.mxu0 0
    %1555 = vmatprep.subr.bf16.mxu0 0
    %1556 = vmatpush2.bf16.msra.mxu0 0
    %1557 = vmatprep.subr.bf16.mxu0 0
    %1558 = vmatpush2.bf16.msra.mxu0 0
    %1559 = vmatprep.subr.bf16.mxu0 0
    %1560 = vmatpush2.bf16.msra.mxu0 0
    %1561 = vmatprep.subr.bf16.mxu0 0
    %1562 = vmatpush2.bf16.msra.mxu0 0
    %1563 = vmatprep.subr.bf16.mxu0 0
    %1564 = vmatpush2.bf16.msra.mxu0 0
    %1565 = vmatprep.subr.bf16.mxu0 0
    %1566 = vmatpush2.bf16.msra.mxu0 0
    %1567 = vmatprep.subr.bf16.mxu0 0
    %1568 = vmatpush2.bf16.msra.mxu0 0
    %1569 = vmatprep.mubr.bf16.mxu0 0
    %1570 = vmatmul.mubr.bf16.gmra.mxu0 %v1495
    %v1571 = vpop.f32.mrf.mxu0
    %v1572 = vadd.f32 %v1531, %v1571
    %v1573 = vpop.f32.mrf.mxu0
    %v1574 = vadd.f32 %v1533, %v1573
    %v1575 = vpop.f32.mrf.mxu0
    %v1576 = vpop.f32.mrf.mxu0
    %1577 = vdwg.mxu0
    %1578 = vmatprep.subr.bf16.mxu0 0
    %1579 = vmatpush1.bf16.msra.mxu0 %v675
    %1580 = vmatprep.subr.bf16.mxu0 0
    %1581 = vmatpush1.bf16.msra.mxu0 %v672
    %1582 = vmatprep.subr.bf16.mxu0 0
    %1583 = vmatpush1.bf16.msra.mxu0 %v669
    %1584 = vmatprep.subr.bf16.mxu0 0
    %1585 = vmatpush1.bf16.msra.mxu0 %v666
    %1586 = vmatprep.subr.bf16.mxu0 0
    %1587 = vmatpush1.bf16.msra.mxu0 %v663
    %1588 = vmatprep.subr.bf16.mxu0 0
    %1589 = vmatpush1.bf16.msra.mxu0 %v660
    %1590 = vmatprep.subr.bf16.mxu0 0
    %1591 = vmatpush1.bf16.msra.mxu0 %v657
    %1592 = vmatprep.subr.bf16.mxu0 0
    %1593 = vmatpush1.bf16.msra.mxu0 %v654
    %1594 = vmatprep.subr.bf16.mxu0 0
    %1595 = vmatpush2.bf16.msra.mxu0 %v699
    %1596 = vmatprep.subr.bf16.mxu0 0
    %1597 = vmatpush2.bf16.msra.mxu0 %v696
    %1598 = vmatprep.subr.bf16.mxu0 0
    %1599 = vmatpush2.bf16.msra.mxu0 %v693
    %1600 = vmatprep.subr.bf16.mxu0 0
    %1601 = vmatpush2.bf16.msra.mxu0 %v690
    %1602 = vmatprep.subr.bf16.mxu0 0
    %1603 = vmatpush2.bf16.msra.mxu0 %v687
    %1604 = vmatprep.subr.bf16.mxu0 0
    %1605 = vmatpush2.bf16.msra.mxu0 %v684
    %1606 = vmatprep.subr.bf16.mxu0 0
    %1607 = vmatpush2.bf16.msra.mxu0 %v681
    %1608 = vmatprep.subr.bf16.mxu0 0
    %1609 = vmatpush2.bf16.msra.mxu0 %v678
    %1610 = vmatprep.mubr.bf16.mxu0 %v1494
    %1611 = vmatmul.mubr.bf16.gmra.mxu0 %v1493
    %v1612 = vpop.f32.mrf.mxu0
    %v1613 = vadd.f32 0.0, %v1612
    %v1614 = vpop.f32.mrf.mxu0
    %v1615 = vpop.f32.mrf.mxu0
    %v1616 = vpop.f32.mrf.mxu0
    %1617 = vdwg.mxu0
    %1618 = vmatprep.subr.bf16.mxu0 0
    %1619 = vmatpush1.bf16.msra.mxu0 %v723
    %1620 = vmatprep.subr.bf16.mxu0 0
    %1621 = vmatpush1.bf16.msra.mxu0 %v720
    %1622 = vmatprep.subr.bf16.mxu0 0
    %1623 = vmatpush1.bf16.msra.mxu0 %v717
    %1624 = vmatprep.subr.bf16.mxu0 0
    %1625 = vmatpush1.bf16.msra.mxu0 %v714
    %1626 = vmatprep.subr.bf16.mxu0 0
    %1627 = vmatpush1.bf16.msra.mxu0 %v711
    %1628 = vmatprep.subr.bf16.mxu0 0
    %1629 = vmatpush1.bf16.msra.mxu0 %v708
    %1630 = vmatprep.subr.bf16.mxu0 0
    %1631 = vmatpush1.bf16.msra.mxu0 %v705
    %1632 = vmatprep.subr.bf16.mxu0 0
    %1633 = vmatpush1.bf16.msra.mxu0 %v702
    %1634 = vmatprep.subr.bf16.mxu0 0
    %1635 = vmatpush2.bf16.msra.mxu0 0
    %1636 = vmatprep.subr.bf16.mxu0 0
    %1637 = vmatpush2.bf16.msra.mxu0 0
    %1638 = vmatprep.subr.bf16.mxu0 0
    %1639 = vmatpush2.bf16.msra.mxu0 0
    %1640 = vmatprep.subr.bf16.mxu0 0
    %1641 = vmatpush2.bf16.msra.mxu0 0
    %1642 = vmatprep.subr.bf16.mxu0 0
    %1643 = vmatpush2.bf16.msra.mxu0 0
    %1644 = vmatprep.subr.bf16.mxu0 0
    %1645 = vmatpush2.bf16.msra.mxu0 0
    %1646 = vmatprep.subr.bf16.mxu0 0
    %1647 = vmatpush2.bf16.msra.mxu0 0
    %1648 = vmatprep.subr.bf16.mxu0 0
    %1649 = vmatpush2.bf16.msra.mxu0 0
    %1650 = vmatprep.mubr.bf16.mxu0 0
    %1651 = vmatmul.mubr.bf16.gmra.mxu0 %v1495
    %v1652 = vpop.f32.mrf.mxu0
    %v1653 = vadd.f32 %v1613, %v1652
    %v1654 = vpop.f32.mrf.mxu0
    %v1655 = vpop.f32.mrf.mxu0
    %v1656 = vpop.f32.mrf.mxu0
    %1657 = vdwg.mxu0
    %v1658 = vadd.f32 %v1490, %v1572
    %v1659 = vadd.f32 %v1491, %v1574
    %v1660 = vadd.f32 %v1492, %v1653
    %v1661 = vtanh.pop %v1658
    %v1662 = vtanh.pop %v1659
    %v1663 = vtanh.pop %v1660
    %s1664 = scalar_lea.vmem [#allocation2], 120
    %v1665 = vld [vmem:[%s1664] sm:$0xff]
    %v1666 = vld [vmem:[%s1664 + $0x8] sm:$0xff]
    %v1667 = vld [vmem:[%s1664 + $0x10] sm:$0xff]
    %v1668 = vpack.c.bf16 %v1661, %v1661
    %v1669 = vpack.c.bf16 %v1662, %v1662
    %v1670 = vpack.c.bf16 %v1663, %v1663
    %1671 = vmatprep.subr.bf16.mxu0 %v674
    %1672 = vmatpush1.bf16.msra.mxu0 %v673
    %1673 = vmatprep.subr.bf16.mxu0 %v671
    %1674 = vmatpush1.bf16.msra.mxu0 %v670
    %1675 = vmatprep.subr.bf16.mxu0 %v668
    %1676 = vmatpush1.bf16.msra.mxu0 %v667
    %1677 = vmatprep.subr.bf16.mxu0 %v665
    %1678 = vmatpush1.bf16.msra.mxu0 %v664
    %1679 = vmatprep.subr.bf16.mxu0 %v662
    %1680 = vmatpush1.bf16.msra.mxu0 %v661
    %1681 = vmatprep.subr.bf16.mxu0 %v659
    %1682 = vmatpush1.bf16.msra.mxu0 %v658
    %1683 = vmatprep.subr.bf16.mxu0 %v656
    %1684 = vmatpush1.bf16.msra.mxu0 %v655
    %1685 = vmatprep.subr.bf16.mxu0 %v653
    %1686 = vmatpush1.bf16.msra.mxu0 %v652
    %1687 = vmatprep.subr.bf16.mxu0 %v698
    %1688 = vmatpush2.bf16.msra.mxu0 %v697
    %1689 = vmatprep.subr.bf16.mxu0 %v695
    %1690 = vmatpush2.bf16.msra.mxu0 %v694
    %1691 = vmatprep.subr.bf16.mxu0 %v692
    %1692 = vmatpush2.bf16.msra.mxu0 %v691
    %1693 = vmatprep.subr.bf16.mxu0 %v689
    %1694 = vmatpush2.bf16.msra.mxu0 %v688
    %1695 = vmatprep.subr.bf16.mxu0 %v686
    %1696 = vmatpush2.bf16.msra.mxu0 %v685
    %1697 = vmatprep.subr.bf16.mxu0 %v683
    %1698 = vmatpush2.bf16.msra.mxu0 %v682
    %1699 = vmatprep.subr.bf16.mxu0 %v680
    %1700 = vmatpush2.bf16.msra.mxu0 %v679
    %1701 = vmatprep.subr.bf16.mxu0 %v677
    %1702 = vmatpush2.bf16.msra.mxu0 %v676
    %1703 = vmatprep.mubr.bf16.mxu0 %v1669
    %1704 = vmatmul.mubr.bf16.gmra.mxu0 %v1668
    %v1705 = vpop.f32.mrf.mxu0
    %v1706 = vadd.f32 0.0, %v1705
    %v1707 = vpop.f32.mrf.mxu0
    %v1708 = vadd.f32 0.0, %v1707
    %v1709 = vpop.f32.mrf.mxu0
    %v1710 = vpop.f32.mrf.mxu0
    %1711 = vdwg.mxu0
    %1712 = vmatprep.subr.bf16.mxu0 %v722
    %1713 = vmatpush1.bf16.msra.mxu0 %v721
    %1714 = vmatprep.subr.bf16.mxu0 %v719
    %1715 = vmatpush1.bf16.msra.mxu0 %v718
    %1716 = vmatprep.subr.bf16.mxu0 %v716
    %1717 = vmatpush1.bf16.msra.mxu0 %v715
    %1718 = vmatprep.subr.bf16.mxu0 %v713
    %1719 = vmatpush1.bf16.msra.mxu0 %v712
    %1720 = vmatprep.subr.bf16.mxu0 %v710
    %1721 = vmatpush1.bf16.msra.mxu0 %v709
    %1722 = vmatprep.subr.bf16.mxu0 %v707
    %1723 = vmatpush1.bf16.msra.mxu0 %v706
    %1724 = vmatprep.subr.bf16.mxu0 %v704
    %1725 = vmatpush1.bf16.msra.mxu0 %v703
    %1726 = vmatprep.subr.bf16.mxu0 %v701
    %1727 = vmatpush1.bf16.msra.mxu0 %v700
    %1728 = vmatprep.subr.bf16.mxu0 0
    %1729 = vmatpush2.bf16.msra.mxu0 0
    %1730 = vmatprep.subr.bf16.mxu0 0
    %1731 = vmatpush2.bf16.msra.mxu0 0
    %1732 = vmatprep.subr.bf16.mxu0 0
    %1733 = vmatpush2.bf16.msra.mxu0 0
    %1734 = vmatprep.subr.bf16.mxu0 0
    %1735 = vmatpush2.bf16.msra.mxu0 0
    %1736 = vmatprep.subr.bf16.mxu0 0
    %1737 = vmatpush2.bf16.msra.mxu0 0
    %1738 = vmatprep.subr.bf16.mxu0 0
    %1739 = vmatpush2.bf16.msra.mxu0 0
    %1740 = vmatprep.subr.bf16.mxu0 0
    %1741 = vmatpush2.bf16.msra.mxu0 0
    %1742 = vmatprep.subr.bf16.mxu0 0
    %1743 = vmatpush2.bf16.msra.mxu0 0
    %1744 = vmatprep.mubr.bf16.mxu0 0
    %1745 = vmatmul.mubr.bf16.gmra.mxu0 %v1670
    %v1746 = vpop.f32.mrf.mxu0
    %v1747 = vadd.f32 %v1706, %v1746
    %v1748 = vpop.f32.mrf.mxu0
    %v1749 = vadd.f32 %v1708, %v1748
    %v1750 = vpop.f32.mrf.mxu0
    %v1751 = vpop.f32.mrf.mxu0
    %1752 = vdwg.mxu0
    %1753 = vmatprep.subr.bf16.mxu0 0
    %1754 = vmatpush1.bf16.msra.mxu0 %v675
    %1755 = vmatprep.subr.bf16.mxu0 0
    %1756 = vmatpush1.bf16.msra.mxu0 %v672
    %1757 = vmatprep.subr.bf16.mxu0 0
    %1758 = vmatpush1.bf16.msra.mxu0 %v669
    %1759 = vmatprep.subr.bf16.mxu0 0
    %1760 = vmatpush1.bf16.msra.mxu0 %v666
    %1761 = vmatprep.subr.bf16.mxu0 0
    %1762 = vmatpush1.bf16.msra.mxu0 %v663
    %1763 = vmatprep.subr.bf16.mxu0 0
    %1764 = vmatpush1.bf16.msra.mxu0 %v660
    %1765 = vmatprep.subr.bf16.mxu0 0
    %1766 = vmatpush1.bf16.msra.mxu0 %v657
    %1767 = vmatprep.subr.bf16.mxu0 0
    %1768 = vmatpush1.bf16.msra.mxu0 %v654
    %1769 = vmatprep.subr.bf16.mxu0 0
    %1770 = vmatpush2.bf16.msra.mxu0 %v699
    %1771 = vmatprep.subr.bf16.mxu0 0
    %1772 = vmatpush2.bf16.msra.mxu0 %v696
    %1773 = vmatprep.subr.bf16.mxu0 0
    %1774 = vmatpush2.bf16.msra.mxu0 %v693
    %1775 = vmatprep.subr.bf16.mxu0 0
    %1776 = vmatpush2.bf16.msra.mxu0 %v690
    %1777 = vmatprep.subr.bf16.mxu0 0
    %1778 = vmatpush2.bf16.msra.mxu0 %v687
    %1779 = vmatprep.subr.bf16.mxu0 0
    %1780 = vmatpush2.bf16.msra.mxu0 %v684
    %1781 = vmatprep.subr.bf16.mxu0 0
    %1782 = vmatpush2.bf16.msra.mxu0 %v681
    %1783 = vmatprep.subr.bf16.mxu0 0
    %1784 = vmatpush2.bf16.msra.mxu0 %v678
    %1785 = vmatprep.mubr.bf16.mxu0 %v1669
    %1786 = vmatmul.mubr.bf16.gmra.mxu0 %v1668
    %v1787 = vpop.f32.mrf.mxu0
    %v1788 = vadd.f32 0.0, %v1787
    %v1789 = vpop.f32.mrf.mxu0
    %v1790 = vpop.f32.mrf.mxu0
    %v1791 = vpop.f32.mrf.mxu0
    %1792 = vdwg.mxu0
    %1793 = vmatprep.subr.bf16.mxu0 0
    %1794 = vmatpush1.bf16.msra.mxu0 %v723
    %1795 = vmatprep.subr.bf16.mxu0 0
    %1796 = vmatpush1.bf16.msra.mxu0 %v720
    %1797 = vmatprep.subr.bf16.mxu0 0
    %1798 = vmatpush1.bf16.msra.mxu0 %v717
    %1799 = vmatprep.subr.bf16.mxu0 0
    %1800 = vmatpush1.bf16.msra.mxu0 %v714
    %1801 = vmatprep.subr.bf16.mxu0 0
    %1802 = vmatpush1.bf16.msra.mxu0 %v711
    %1803 = vmatprep.subr.bf16.mxu0 0
    %1804 = vmatpush1.bf16.msra.mxu0 %v708
    %1805 = vmatprep.subr.bf16.mxu0 0
    %1806 = vmatpush1.bf16.msra.mxu0 %v705
    %1807 = vmatprep.subr.bf16.mxu0 0
    %1808 = vmatpush1.bf16.msra.mxu0 %v702
    %1809 = vmatprep.subr.bf16.mxu0 0
    %1810 = vmatpush2.bf16.msra.mxu0 0
    %1811 = vmatprep.subr.bf16.mxu0 0
    %1812 = vmatpush2.bf16.msra.mxu0 0
    %1813 = vmatprep.subr.bf16.mxu0 0
    %1814 = vmatpush2.bf16.msra.mxu0 0
    %1815 = vmatprep.subr.bf16.mxu0 0
    %1816 = vmatpush2.bf16.msra.mxu0 0
    %1817 = vmatprep.subr.bf16.mxu0 0
    %1818 = vmatpush2.bf16.msra.mxu0 0
    %1819 = vmatprep.subr.bf16.mxu0 0
    %1820 = vmatpush2.bf16.msra.mxu0 0
    %1821 = vmatprep.subr.bf16.mxu0 0
    %1822 = vmatpush2.bf16.msra.mxu0 0
    %1823 = vmatprep.subr.bf16.mxu0 0
    %1824 = vmatpush2.bf16.msra.mxu0 0
    %1825 = vmatprep.mubr.bf16.mxu0 0
    %1826 = vmatmul.mubr.bf16.gmra.mxu0 %v1670
    %v1827 = vpop.f32.mrf.mxu0
    %v1828 = vadd.f32 %v1788, %v1827
    %v1829 = vpop.f32.mrf.mxu0
    %v1830 = vpop.f32.mrf.mxu0
    %v1831 = vpop.f32.mrf.mxu0
    %1832 = vdwg.mxu0
    %v1833 = vadd.f32 %v1665, %v1747
    %v1834 = vadd.f32 %v1666, %v1749
    %v1835 = vadd.f32 %v1667, %v1828
    %v1836 = vtanh.pop %v1833
    %v1837 = vtanh.pop %v1834
    %v1838 = vtanh.pop %v1835
    %s1839 = scalar_lea.vmem [#allocation2], 144
    %v1840 = vld [vmem:[%s1839] sm:$0xff]
    %v1841 = vld [vmem:[%s1839 + $0x8] sm:$0xff]
    %v1842 = vld [vmem:[%s1839 + $0x10] sm:$0xff]
    %v1843 = vpack.c.bf16 %v1836, %v1836
    %v1844 = vpack.c.bf16 %v1837, %v1837
    %v1845 = vpack.c.bf16 %v1838, %v1838
    %1846 = vmatprep.subr.bf16.mxu0 %v674
    %1847 = vmatpush1.bf16.msra.mxu0 %v673
    %1848 = vmatprep.subr.bf16.mxu0 %v671
    %1849 = vmatpush1.bf16.msra.mxu0 %v670
    %1850 = vmatprep.subr.bf16.mxu0 %v668
    %1851 = vmatpush1.bf16.msra.mxu0 %v667
    %1852 = vmatprep.subr.bf16.mxu0 %v665
    %1853 = vmatpush1.bf16.msra.mxu0 %v664
    %1854 = vmatprep.subr.bf16.mxu0 %v662
    %1855 = vmatpush1.bf16.msra.mxu0 %v661
    %1856 = vmatprep.subr.bf16.mxu0 %v659
    %1857 = vmatpush1.bf16.msra.mxu0 %v658
    %1858 = vmatprep.subr.bf16.mxu0 %v656
    %1859 = vmatpush1.bf16.msra.mxu0 %v655
    %1860 = vmatprep.subr.bf16.mxu0 %v653
    %1861 = vmatpush1.bf16.msra.mxu0 %v652
    %1862 = vmatprep.subr.bf16.mxu0 %v698
    %1863 = vmatpush2.bf16.msra.mxu0 %v697
    %1864 = vmatprep.subr.bf16.mxu0 %v695
    %1865 = vmatpush2.bf16.msra.mxu0 %v694
    %1866 = vmatprep.subr.bf16.mxu0 %v692
    %1867 = vmatpush2.bf16.msra.mxu0 %v691
    %1868 = vmatprep.subr.bf16.mxu0 %v689
    %1869 = vmatpush2.bf16.msra.mxu0 %v688
    %1870 = vmatprep.subr.bf16.mxu0 %v686
    %1871 = vmatpush2.bf16.msra.mxu0 %v685
    %1872 = vmatprep.subr.bf16.mxu0 %v683
    %1873 = vmatpush2.bf16.msra.mxu0 %v682
    %1874 = vmatprep.subr.bf16.mxu0 %v680
    %1875 = vmatpush2.bf16.msra.mxu0 %v679
    %1876 = vmatprep.subr.bf16.mxu0 %v677
    %1877 = vmatpush2.bf16.msra.mxu0 %v676
    %1878 = vmatprep.mubr.bf16.mxu0 %v1844
    %1879 = vmatmul.mubr.bf16.gmra.mxu0 %v1843
    %v1880 = vpop.f32.mrf.mxu0
    %v1881 = vadd.f32 0.0, %v1880
    %v1882 = vpop.f32.mrf.mxu0
    %v1883 = vadd.f32 0.0, %v1882
    %v1884 = vpop.f32.mrf.mxu0
    %v1885 = vpop.f32.mrf.mxu0
    %1886 = vdwg.mxu0
    %1887 = vmatprep.subr.bf16.mxu0 %v722
    %1888 = vmatpush1.bf16.msra.mxu0 %v721
    %1889 = vmatprep.subr.bf16.mxu0 %v719
    %1890 = vmatpush1.bf16.msra.mxu0 %v718
    %1891 = vmatprep.subr.bf16.mxu0 %v716
    %1892 = vmatpush1.bf16.msra.mxu0 %v715
    %1893 = vmatprep.subr.bf16.mxu0 %v713
    %1894 = vmatpush1.bf16.msra.mxu0 %v712
    %1895 = vmatprep.subr.bf16.mxu0 %v710
    %1896 = vmatpush1.bf16.msra.mxu0 %v709
    %1897 = vmatprep.subr.bf16.mxu0 %v707
    %1898 = vmatpush1.bf16.msra.mxu0 %v706
    %1899 = vmatprep.subr.bf16.mxu0 %v704
    %1900 = vmatpush1.bf16.msra.mxu0 %v703
    %1901 = vmatprep.subr.bf16.mxu0 %v701
    %1902 = vmatpush1.bf16.msra.mxu0 %v700
    %1903 = vmatprep.subr.bf16.mxu0 0
    %1904 = vmatpush2.bf16.msra.mxu0 0
    %1905 = vmatprep.subr.bf16.mxu0 0
    %1906 = vmatpush2.bf16.msra.mxu0 0
    %1907 = vmatprep.subr.bf16.mxu0 0
    %1908 = vmatpush2.bf16.msra.mxu0 0
    %1909 = vmatprep.subr.bf16.mxu0 0
    %1910 = vmatpush2.bf16.msra.mxu0 0
    %1911 = vmatprep.subr.bf16.mxu0 0
    %1912 = vmatpush2.bf16.msra.mxu0 0
    %1913 = vmatprep.subr.bf16.mxu0 0
    %1914 = vmatpush2.bf16.msra.mxu0 0
    %1915 = vmatprep.subr.bf16.mxu0 0
    %1916 = vmatpush2.bf16.msra.mxu0 0
    %1917 = vmatprep.subr.bf16.mxu0 0
    %1918 = vmatpush2.bf16.msra.mxu0 0
    %1919 = vmatprep.mubr.bf16.mxu0 0
    %1920 = vmatmul.mubr.bf16.gmra.mxu0 %v1845
    %v1921 = vpop.f32.mrf.mxu0
    %v1922 = vadd.f32 %v1881, %v1921
    %v1923 = vpop.f32.mrf.mxu0
    %v1924 = vadd.f32 %v1883, %v1923
    %v1925 = vpop.f32.mrf.mxu0
    %v1926 = vpop.f32.mrf.mxu0
    %1927 = vdwg.mxu0
    %1928 = vmatprep.subr.bf16.mxu0 0
    %1929 = vmatpush1.bf16.msra.mxu0 %v675
    %1930 = vmatprep.subr.bf16.mxu0 0
    %1931 = vmatpush1.bf16.msra.mxu0 %v672
    %1932 = vmatprep.subr.bf16.mxu0 0
    %1933 = vmatpush1.bf16.msra.mxu0 %v669
    %1934 = vmatprep.subr.bf16.mxu0 0
    %1935 = vmatpush1.bf16.msra.mxu0 %v666
    %1936 = vmatprep.subr.bf16.mxu0 0
    %1937 = vmatpush1.bf16.msra.mxu0 %v663
    %1938 = vmatprep.subr.bf16.mxu0 0
    %1939 = vmatpush1.bf16.msra.mxu0 %v660
    %1940 = vmatprep.subr.bf16.mxu0 0
    %1941 = vmatpush1.bf16.msra.mxu0 %v657
    %1942 = vmatprep.subr.bf16.mxu0 0
    %1943 = vmatpush1.bf16.msra.mxu0 %v654
    %1944 = vmatprep.subr.bf16.mxu0 0
    %1945 = vmatpush2.bf16.msra.mxu0 %v699
    %1946 = vmatprep.subr.bf16.mxu0 0
    %1947 = vmatpush2.bf16.msra.mxu0 %v696
    %1948 = vmatprep.subr.bf16.mxu0 0
    %1949 = vmatpush2.bf16.msra.mxu0 %v693
    %1950 = vmatprep.subr.bf16.mxu0 0
    %1951 = vmatpush2.bf16.msra.mxu0 %v690
    %1952 = vmatprep.subr.bf16.mxu0 0
    %1953 = vmatpush2.bf16.msra.mxu0 %v687
    %1954 = vmatprep.subr.bf16.mxu0 0
    %1955 = vmatpush2.bf16.msra.mxu0 %v684
    %1956 = vmatprep.subr.bf16.mxu0 0
    %1957 = vmatpush2.bf16.msra.mxu0 %v681
    %1958 = vmatprep.subr.bf16.mxu0 0
    %1959 = vmatpush2.bf16.msra.mxu0 %v678
    %1960 = vmatprep.mubr.bf16.mxu0 %v1844
    %1961 = vmatmul.mubr.bf16.gmra.mxu0 %v1843
    %v1962 = vpop.f32.mrf.mxu0
    %v1963 = vadd.f32 0.0, %v1962
    %v1964 = vpop.f32.mrf.mxu0
    %v1965 = vpop.f32.mrf.mxu0
    %v1966 = vpop.f32.mrf.mxu0
    %1967 = vdwg.mxu0
    %1968 = vmatprep.subr.bf16.mxu0 0
    %1969 = vmatpush1.bf16.msra.mxu0 %v723
    %1970 = vmatprep.subr.bf16.mxu0 0
    %1971 = vmatpush1.bf16.msra.mxu0 %v720
    %1972 = vmatprep.subr.bf16.mxu0 0
    %1973 = vmatpush1.bf16.msra.mxu0 %v717
    %1974 = vmatprep.subr.bf16.mxu0 0
    %1975 = vmatpush1.bf16.msra.mxu0 %v714
    %1976 = vmatprep.subr.bf16.mxu0 0
    %1977 = vmatpush1.bf16.msra.mxu0 %v711
    %1978 = vmatprep.subr.bf16.mxu0 0
    %1979 = vmatpush1.bf16.msra.mxu0 %v708
    %1980 = vmatprep.subr.bf16.mxu0 0
    %1981 = vmatpush1.bf16.msra.mxu0 %v705
    %1982 = vmatprep.subr.bf16.mxu0 0
    %1983 = vmatpush1.bf16.msra.mxu0 %v702
    %1984 = vmatprep.subr.bf16.mxu0 0
    %1985 = vmatpush2.bf16.msra.mxu0 0
    %1986 = vmatprep.subr.bf16.mxu0 0
    %1987 = vmatpush2.bf16.msra.mxu0 0
    %1988 = vmatprep.subr.bf16.mxu0 0
    %1989 = vmatpush2.bf16.msra.mxu0 0
    %1990 = vmatprep.subr.bf16.mxu0 0
    %1991 = vmatpush2.bf16.msra.mxu0 0
    %1992 = vmatprep.subr.bf16.mxu0 0
    %1993 = vmatpush2.bf16.msra.mxu0 0
    %1994 = vmatprep.subr.bf16.mxu0 0
    %1995 = vmatpush2.bf16.msra.mxu0 0
    %1996 = vmatprep.subr.bf16.mxu0 0
    %1997 = vmatpush2.bf16.msra.mxu0 0
    %1998 = vmatprep.subr.bf16.mxu0 0
    %1999 = vmatpush2.bf16.msra.mxu0 0
    %2000 = vmatprep.mubr.bf16.mxu0 0
    %2001 = vmatmul.mubr.bf16.gmra.mxu0 %v1845
    %v2002 = vpop.f32.mrf.mxu0
    %v2003 = vadd.f32 %v1963, %v2002
    %v2004 = vpop.f32.mrf.mxu0
    %v2005 = vpop.f32.mrf.mxu0
    %v2006 = vpop.f32.mrf.mxu0
    %2007 = vdwg.mxu0
    %v2008 = vadd.f32 %v1840, %v1922
    %v2009 = vadd.f32 %v1841, %v1924
    %v2010 = vadd.f32 %v1842, %v2003
    %v2011 = vtanh.pop %v2008
    %v2012 = vtanh.pop %v2009
    %v2013 = vtanh.pop %v2010
    %s2014 = scalar_lea.vmem [#allocation2], 168
    %v2015 = vld [vmem:[%s2014] sm:$0xff]
    %v2016 = vld [vmem:[%s2014 + $0x8] sm:$0xff]
    %v2017 = vld [vmem:[%s2014 + $0x10] sm:$0xff]
    %v2018 = vpack.c.bf16 %v2011, %v2011
    %v2019 = vpack.c.bf16 %v2012, %v2012
    %v2020 = vpack.c.bf16 %v2013, %v2013
    %2021 = vmatprep.subr.bf16.mxu0 %v674
    %2022 = vmatpush1.bf16.msra.mxu0 %v673
    %2023 = vmatprep.subr.bf16.mxu0 %v671
    %2024 = vmatpush1.bf16.msra.mxu0 %v670
    %2025 = vmatprep.subr.bf16.mxu0 %v668
    %2026 = vmatpush1.bf16.msra.mxu0 %v667
    %2027 = vmatprep.subr.bf16.mxu0 %v665
    %2028 = vmatpush1.bf16.msra.mxu0 %v664
    %2029 = vmatprep.subr.bf16.mxu0 %v662
    %2030 = vmatpush1.bf16.msra.mxu0 %v661
    %2031 = vmatprep.subr.bf16.mxu0 %v659
    %2032 = vmatpush1.bf16.msra.mxu0 %v658
    %2033 = vmatprep.subr.bf16.mxu0 %v656
    %2034 = vmatpush1.bf16.msra.mxu0 %v655
    %2035 = vmatprep.subr.bf16.mxu0 %v653
    %2036 = vmatpush1.bf16.msra.mxu0 %v652
    %2037 = vmatprep.subr.bf16.mxu0 %v698
    %2038 = vmatpush2.bf16.msra.mxu0 %v697
    %2039 = vmatprep.subr.bf16.mxu0 %v695
    %2040 = vmatpush2.bf16.msra.mxu0 %v694
    %2041 = vmatprep.subr.bf16.mxu0 %v692
    %2042 = vmatpush2.bf16.msra.mxu0 %v691
    %2043 = vmatprep.subr.bf16.mxu0 %v689
    %2044 = vmatpush2.bf16.msra.mxu0 %v688
    %2045 = vmatprep.subr.bf16.mxu0 %v686
    %2046 = vmatpush2.bf16.msra.mxu0 %v685
    %2047 = vmatprep.subr.bf16.mxu0 %v683
    %2048 = vmatpush2.bf16.msra.mxu0 %v682
    %2049 = vmatprep.subr.bf16.mxu0 %v680
    %2050 = vmatpush2.bf16.msra.mxu0 %v679
    %2051 = vmatprep.subr.bf16.mxu0 %v677
    %2052 = vmatpush2.bf16.msra.mxu0 %v676
    %2053 = vmatprep.mubr.bf16.mxu0 %v2019
    %2054 = vmatmul.mubr.bf16.gmra.mxu0 %v2018
    %v2055 = vpop.f32.mrf.mxu0
    %v2056 = vadd.f32 0.0, %v2055
    %v2057 = vpop.f32.mrf.mxu0
    %v2058 = vadd.f32 0.0, %v2057
    %v2059 = vpop.f32.mrf.mxu0
    %v2060 = vpop.f32.mrf.mxu0
    %2061 = vdwg.mxu0
    %2062 = vmatprep.subr.bf16.mxu0 %v722
    %2063 = vmatpush1.bf16.msra.mxu0 %v721
    %2064 = vmatprep.subr.bf16.mxu0 %v719
    %2065 = vmatpush1.bf16.msra.mxu0 %v718
    %2066 = vmatprep.subr.bf16.mxu0 %v716
    %2067 = vmatpush1.bf16.msra.mxu0 %v715
    %2068 = vmatprep.subr.bf16.mxu0 %v713
    %2069 = vmatpush1.bf16.msra.mxu0 %v712
    %2070 = vmatprep.subr.bf16.mxu0 %v710
    %2071 = vmatpush1.bf16.msra.mxu0 %v709
    %2072 = vmatprep.subr.bf16.mxu0 %v707
    %2073 = vmatpush1.bf16.msra.mxu0 %v706
    %2074 = vmatprep.subr.bf16.mxu0 %v704
    %2075 = vmatpush1.bf16.msra.mxu0 %v703
    %2076 = vmatprep.subr.bf16.mxu0 %v701
    %2077 = vmatpush1.bf16.msra.mxu0 %v700
    %2078 = vmatprep.subr.bf16.mxu0 0
    %2079 = vmatpush2.bf16.msra.mxu0 0
    %2080 = vmatprep.subr.bf16.mxu0 0
    %2081 = vmatpush2.bf16.msra.mxu0 0
    %2082 = vmatprep.subr.bf16.mxu0 0
    %2083 = vmatpush2.bf16.msra.mxu0 0
    %2084 = vmatprep.subr.bf16.mxu0 0
    %2085 = vmatpush2.bf16.msra.mxu0 0
    %2086 = vmatprep.subr.bf16.mxu0 0
    %2087 = vmatpush2.bf16.msra.mxu0 0
    %2088 = vmatprep.subr.bf16.mxu0 0
    %2089 = vmatpush2.bf16.msra.mxu0 0
    %2090 = vmatprep.subr.bf16.mxu0 0
    %2091 = vmatpush2.bf16.msra.mxu0 0
    %2092 = vmatprep.subr.bf16.mxu0 0
    %2093 = vmatpush2.bf16.msra.mxu0 0
    %2094 = vmatprep.mubr.bf16.mxu0 0
    %2095 = vmatmul.mubr.bf16.gmra.mxu0 %v2020
    %v2096 = vpop.f32.mrf.mxu0
    %v2097 = vadd.f32 %v2056, %v2096
    %v2098 = vpop.f32.mrf.mxu0
    %v2099 = vadd.f32 %v2058, %v2098
    %v2100 = vpop.f32.mrf.mxu0
    %v2101 = vpop.f32.mrf.mxu0
    %2102 = vdwg.mxu0
    %2103 = vmatprep.subr.bf16.mxu0 0
    %2104 = vmatpush1.bf16.msra.mxu0 %v675
    %2105 = vmatprep.subr.bf16.mxu0 0
    %2106 = vmatpush1.bf16.msra.mxu0 %v672
    %2107 = vmatprep.subr.bf16.mxu0 0
    %2108 = vmatpush1.bf16.msra.mxu0 %v669
    %2109 = vmatprep.subr.bf16.mxu0 0
    %2110 = vmatpush1.bf16.msra.mxu0 %v666
    %2111 = vmatprep.subr.bf16.mxu0 0
    %2112 = vmatpush1.bf16.msra.mxu0 %v663
    %2113 = vmatprep.subr.bf16.mxu0 0
    %2114 = vmatpush1.bf16.msra.mxu0 %v660
    %2115 = vmatprep.subr.bf16.mxu0 0
    %2116 = vmatpush1.bf16.msra.mxu0 %v657
    %2117 = vmatprep.subr.bf16.mxu0 0
    %2118 = vmatpush1.bf16.msra.mxu0 %v654
    %2119 = vmatprep.subr.bf16.mxu0 0
    %2120 = vmatpush2.bf16.msra.mxu0 %v699
    %2121 = vmatprep.subr.bf16.mxu0 0
    %2122 = vmatpush2.bf16.msra.mxu0 %v696
    %2123 = vmatprep.subr.bf16.mxu0 0
    %2124 = vmatpush2.bf16.msra.mxu0 %v693
    %2125 = vmatprep.subr.bf16.mxu0 0
    %2126 = vmatpush2.bf16.msra.mxu0 %v690
    %2127 = vmatprep.subr.bf16.mxu0 0
    %2128 = vmatpush2.bf16.msra.mxu0 %v687
    %2129 = vmatprep.subr.bf16.mxu0 0
    %2130 = vmatpush2.bf16.msra.mxu0 %v684
    %2131 = vmatprep.subr.bf16.mxu0 0
    %2132 = vmatpush2.bf16.msra.mxu0 %v681
    %2133 = vmatprep.subr.bf16.mxu0 0
    %2134 = vmatpush2.bf16.msra.mxu0 %v678
    %2135 = vmatprep.mubr.bf16.mxu0 %v2019
    %2136 = vmatmul.mubr.bf16.gmra.mxu0 %v2018
    %v2137 = vpop.f32.mrf.mxu0
    %v2138 = vadd.f32 0.0, %v2137
    %v2139 = vpop.f32.mrf.mxu0
    %v2140 = vpop.f32.mrf.mxu0
    %v2141 = vpop.f32.mrf.mxu0
    %2142 = vdwg.mxu0
    %2143 = vmatprep.subr.bf16.mxu0 0
    %2144 = vmatpush1.bf16.msra.mxu0 %v723
    %2145 = vmatprep.subr.bf16.mxu0 0
    %2146 = vmatpush1.bf16.msra.mxu0 %v720
    %2147 = vmatprep.subr.bf16.mxu0 0
    %2148 = vmatpush1.bf16.msra.mxu0 %v717
    %2149 = vmatprep.subr.bf16.mxu0 0
    %2150 = vmatpush1.bf16.msra.mxu0 %v714
    %2151 = vmatprep.subr.bf16.mxu0 0
    %2152 = vmatpush1.bf16.msra.mxu0 %v711
    %2153 = vmatprep.subr.bf16.mxu0 0
    %2154 = vmatpush1.bf16.msra.mxu0 %v708
    %2155 = vmatprep.subr.bf16.mxu0 0
    %2156 = vmatpush1.bf16.msra.mxu0 %v705
    %2157 = vmatprep.subr.bf16.mxu0 0
    %2158 = vmatpush1.bf16.msra.mxu0 %v702
    %2159 = vmatprep.subr.bf16.mxu0 0
    %2160 = vmatpush2.bf16.msra.mxu0 0
    %2161 = vmatprep.subr.bf16.mxu0 0
    %2162 = vmatpush2.bf16.msra.mxu0 0
    %2163 = vmatprep.subr.bf16.mxu0 0
    %2164 = vmatpush2.bf16.msra.mxu0 0
    %2165 = vmatprep.subr.bf16.mxu0 0
    %2166 = vmatpush2.bf16.msra.mxu0 0
    %2167 = vmatprep.subr.bf16.mxu0 0
    %2168 = vmatpush2.bf16.msra.mxu0 0
    %2169 = vmatprep.subr.bf16.mxu0 0
    %2170 = vmatpush2.bf16.msra.mxu0 0
    %2171 = vmatprep.subr.bf16.mxu0 0
    %2172 = vmatpush2.bf16.msra.mxu0 0
    %2173 = vmatprep.subr.bf16.mxu0 0
    %2174 = vmatpush2.bf16.msra.mxu0 0
    %2175 = vmatprep.mubr.bf16.mxu0 0
    %2176 = vmatmul.mubr.bf16.gmra.mxu0 %v2020
    %v2177 = vpop.f32.mrf.mxu0
    %v2178 = vadd.f32 %v2138, %v2177
    %v2179 = vpop.f32.mrf.mxu0
    %v2180 = vpop.f32.mrf.mxu0
    %v2181 = vpop.f32.mrf.mxu0
    %2182 = vdwg.mxu0
    %v2183 = vadd.f32 %v2015, %v2097
    %v2184 = vadd.f32 %v2016, %v2099
    %v2185 = vadd.f32 %v2017, %v2178
    %v2186 = vtanh.pop %v2183
    %v2187 = vtanh.pop %v2184
    %v2188 = vtanh.pop %v2185
    %2189 = vst [vmem:[#allocation9] sm:$0xff] %v2186
    %2190 = vst [vmem:[#allocation9 + $0x8] sm:$0xff] %v2187
    %2191 = vst [vmem:[#allocation9 + $0x10] sm:$0xff] %v2188
    // Predicated region
    $region34: #{tpu_custom_call.1} parent=1 // pred_check
      _
    $region35: #{tpu_custom_call.1} parent=1 // pred_check_branch
      %2193 = sbr.rel (0) target = $region37
    $region36: #{tpu_custom_call.1} parent=1 // pred_region
      %s2195 = ssub.s32 384, 384
      %2196 = vsyncadd [#allocation5], %s2195
      %s2198 = sshll.u32 [#allocation9], 4
      %s2199 = int_to_ptr.vmem [resolvable:$true] %s2198
      %2201 = dma.vmem_to_hbm [thread:$0]  %s2199, 384, %s4, [#allocation5]
    $region37: #{tpu_custom_call.1} parent=1 // pred_fallthru
      _
    // Predicated region
    $region38: #{tpu_custom_call.1} parent=1 // pred_check
      _
    $region39: #{tpu_custom_call.1} parent=1 // pred_check_branch
      %2203 = sbr.rel (0) target = $region41
    $region40: #{tpu_custom_call.1} parent=1 // pred_region
      %2204 = dma.done [#allocation5], 384
    $region41: #{tpu_custom_call.1} parent=1 // pred_fallthru
      _
    %2205 = vsyncpa [#allocation4], 1
    %2206 = vsyncpa [#allocation7], 1
    %2207 = vsyncpa [#allocation5], 1

</llo_original>
